<compile_context>
chip_gen: v7x
topology: tpu7x:2x2x1
jax: 0.10.0
libtpu: 0.0.40
codegen_flags: <defaults>
</compile_context>

<pallas_src>
import jax
import jax.numpy as jnp
from jax.experimental import pallas as pl
from jax.experimental.pallas import tpu as pltpu


# ----------------------------------------------------------------------------
# Pallas kernel: fused bidirectional GRU (torch.nn.GRU semantics, gates r,z,n)
# ----------------------------------------------------------------------------
def _bigru_fused_kernel(x_ref, wih_ref, whh_ref, bgx_ref, bhn_ref,
                        out_ref, h_ref, gx_ref):
    # x_ref  : (Tc, Bp, Dc)   bf16  lane-packed [x_fw | x_bw | pad], this chunk
    # wih_ref: (Dc, 3*G)      bf16  block-diagonal fused input weights
    # whh_ref: (G, 3*G)       bf16  block-diagonal fused recurrent weights
    # bgx_ref: (1, 3*G)       f32   b_ih + [b_hr, b_hz, 0]   (both directions)
    # bhn_ref: (1, G)         f32   b_hn                      (both directions)
    # out_ref: (Tc, Bp, G)    f32   hidden slab [h_fw | h_bw | pad] per step
    # h_ref  : (Bp, G)        f32   running hidden slab (persists over chunks)
    # gx_ref : (Tc, Bp, 3*G)  bf16  hoisted input projection for this chunk
    Tc, Bp, Dc = x_ref.shape
    G = h_ref.shape[-1]

    @pl.when(pl.program_id(0) == 0)
    def _():
        h_ref[...] = jnp.zeros_like(h_ref)

    # ---- hoisted input projection: one large MXU matmul per time chunk -----
    # TODO(synk): a further win is interleaving this matmul with the step loop
    # (feed MXU idle cycles) and keeping whh resident via matmul_push_rhs.
    gx = jnp.dot(x_ref[...].reshape(Tc * Bp, Dc), wih_ref[...],
                 preferred_element_type=jnp.float32)
    gx_ref[...] = (gx + bgx_ref[...]).astype(jnp.bfloat16).reshape(Tc, Bp, 3 * G)

    whh = whh_ref[...]
    # Hoist the (1,G)->(Bp,G) broadcast out of the unrolled loop (no CSE).
    b_hn = jnp.broadcast_to(bhn_ref[...], (Bp, G))

    def sigmoid1(v):
        # single-EUP sigmoid: sigma(x) = 0.5 * (1 + tanh(x/2))
        return 0.5 * (jnp.tanh(0.5 * v) + 1.0)

    # ---- sequential recurrence: ONE h @ W_hh advances both directions ------
    def step(t, h_prev):
        g = gx_ref[t].astype(jnp.float32)                        # (Bp, 3G)
        gh = jnp.dot(h_prev.astype(whh.dtype), whh,
                     preferred_element_type=jnp.float32)         # (Bp, 3G)
        r = sigmoid1(g[:, 0:G] + gh[:, 0:G])
        z = sigmoid1(g[:, G:2 * G] + gh[:, G:2 * G])
        n = jnp.tanh(g[:, 2 * G:] + r * (gh[:, 2 * G:] + b_hn))
        h_new = (1.0 - z) * n + z * h_prev
        out_ref[t] = h_new
        return h_new

    # Partial unroll: steps are serially dependent, full unroll only bloats
    # live ranges / risks vreg spills.
    h_ref[...] = jax.lax.fori_loop(0, Tc, step, h_ref[...], unroll=8)


# ----------------------------------------------------------------------------
# Host-side shape / weight preparation helpers
# ----------------------------------------------------------------------------
def _round_up(x, m):
    return (x + m - 1) // m * m


def _fuse_gru_params(params, D, H, Dc, G):
    """Build block-diagonal, gate-slab-packed fused weights.

    Hidden slab lane layout (width G = round_up(2H,128)):  [fw 0:H | bw H:2H | 0].
    Gate axis (width 3G): [r-slab | z-slab | n-slab], each slab laid out as above.
    Input slab lane layout (width Dc = round_up(2D,128)):  [x_fw 0:D | x_bw D:2D | 0].
    Zero blocks guarantee no cross-direction / padding contamination.
    """
    f32 = jnp.float32
    w_ih = jnp.zeros((Dc, 3 * G), f32)
    w_hh = jnp.zeros((G, 3 * G), f32)
    b_gx = jnp.zeros((1, 3 * G), f32)
    b_hn = jnp.zeros((1, G), f32)
    for p, off in ((params["fw"], 0), (params["bw"], 1)):
        wi = jnp.transpose(p["w_ih"]).astype(f32)     # (D, 3H), cols = r|z|n
        wh = jnp.transpose(p["w_hh"]).astype(f32)     # (H, 3H)
        b_ih = p["b_ih"].astype(f32)
        b_hh = p["b_hh"].astype(f32)
        r_in = off * D     # row offset of this direction inside the x slab
        r_h = off * H      # row/col offset of this direction inside an h slab
        for g in range(3):
            c = g * G + r_h
            w_ih = w_ih.at[r_in:r_in + D, c:c + H].set(wi[:, g * H:(g + 1) * H])
            w_hh = w_hh.at[r_h:r_h + H, c:c + H].set(wh[:, g * H:(g + 1) * H])
            bg = b_ih[g * H:(g + 1) * H]
            if g < 2:                      # b_hr, b_hz fold into gx; b_hn stays
                bg = bg + b_hh[g * H:(g + 1) * H]
            b_gx = b_gx.at[0, c:c + H].set(bg)
        b_hn = b_hn.at[0, r_h:r_h + H].set(b_hh[2 * H:3 * H])
    return (w_ih.astype(jnp.bfloat16), w_hh.astype(jnp.bfloat16), b_gx, b_hn)


def _bigru_pallas(x_fw, x_bw, params, hid_dim, t_chunk=128):
    """x_fw/x_bw: (B, T, D) f32. Returns (out_fw, out_bw), each (B, T, H) f32."""
    B, T, D = x_fw.shape
    H = hid_dim
    Bp = _round_up(max(B, 1), 16)          # bf16 sublane packing
    Dc = _round_up(2 * D, 128)             # lane-packed input slab (fw|bw|pad)
    G = _round_up(2 * H, 128)              # lane-packed hidden slab (fw|bw|pad)
    Tc = min(t_chunk, T)
    Tp = _round_up(T, Tc)
    n_chunks = Tp // Tc

    # --- time-major, lane-pack both directions, pad, bf16 for MXU ------------
    x_pair = jnp.concatenate(
        [jnp.transpose(x_fw, (1, 0, 2)), jnp.transpose(x_bw, (1, 0, 2))],
        axis=-1)                                                 # (T, B, 2D)
    X = jnp.zeros((Tp, Bp, Dc), jnp.float32)
    X = X.at[:T, :B, :2 * D].set(x_pair).astype(jnp.bfloat16)

    w_ih, w_hh, b_gx, b_hn = _fuse_gru_params(params, D, H, Dc, G)

    # --- explicit VMEM budget (conservative cap for v7x's 64 MiB) ------------
    block_bytes = (
        2 * (Tc * Bp * Dc * 2)                          # x blocks (2 buffers)
        + 2 * (Tc * Bp * G * 4)                         # out blocks (2 buffers)
        + 2 * (Dc * 3 * G * 2 + G * 3 * G * 2 + 4 * G * 4)  # weights / biases
        + Bp * G * 4 + Tc * Bp * 3 * G * 2)             # scratch (h f32, gx bf16)
    # TODO(synk): allow up to ~100 MiB on v5e/v6e (128 MiB chips); keep <=48 MiB on v7x.
    vmem_limit = int(min(max(block_bytes + (1 << 20), 4 << 20), 48 << 20))

    cost = pl.CostEstimate(
        flops=int(2 * Tp * Bp * (Dc * 3 * G + G * 3 * G)),
        transcendentals=int(Tp * Bp * 3 * G),
        bytes_accessed=int(X.size * 2 + Tp * Bp * G * 4
                           + w_ih.size * 2 + w_hh.size * 2),
    )

    # TODO(synk): on v7x (2 TCs/chip) split independent batch halves across
    # cores via pl.core_map / CORE_PARALLEL for another ~2x; kept single-TC
    # codegen here for portability.
    out = pl.pallas_call(
        _bigru_fused_kernel,
        out_shape=jax.ShapeDtypeStruct((Tp, Bp, G), jnp.float32),
        grid=(n_chunks,),
        in_specs=[
            pl.BlockSpec((Tc, Bp, Dc), lambda c: (c, 0, 0)),
            pl.BlockSpec((Dc, 3 * G), lambda c: (0, 0)),
            pl.BlockSpec((G, 3 * G), lambda c: (0, 0)),
            pl.BlockSpec((1, 3 * G), lambda c: (0, 0)),
            pl.BlockSpec((1, G), lambda c: (0, 0)),
        ],
        out_specs=pl.BlockSpec((Tc, Bp, G), lambda c: (c, 0, 0)),
        scratch_shapes=[
            pltpu.VMEM((Bp, G), jnp.float32),             # running hidden slab
            pltpu.VMEM((Tc, Bp, 3 * G), jnp.bfloat16),    # hoisted input proj
        ],
        compiler_params=pltpu.CompilerParams(
            dimension_semantics=("arbitrary",),           # serial recurrence
            vmem_limit_bytes=vmem_limit),
        cost_estimate=cost,
    )(X, w_ih, w_hh, b_gx, b_hn)

    out = out[:T, :B]                                     # strip time/batch pad
    out_fw = jnp.transpose(out[..., 0:H], (1, 0, 2))      # (B, T, H)
    out_bw = jnp.transpose(out[..., H:2 * H], (1, 0, 2))  # (B, T, H)
    # NOTE: the kernel's final carried h includes padded time steps — never
    # exposed; only per-step outputs (sliced above) are returned.
    return out_fw, out_bw


# ----------------------------------------------------------------------------
# Glue: utils.reverse_padded_sequence equivalent (reverse the valid prefix,
# padding positions stay in place).
# ----------------------------------------------------------------------------
def reverse_padded_sequence(x, lengths):
    # x: (B, T, D), lengths: (B,) int
    _, T, _ = x.shape
    t = jnp.arange(T)[None, :]
    ln = lengths[:, None]
    idx = jnp.where(t < ln, ln - 1 - t, t)
    return jnp.take_along_axis(x, idx[:, :, None], axis=1)


# ----------------------------------------------------------------------------
# LeafRNN forward (bidirectional)
# ----------------------------------------------------------------------------
@jax.jit
def leaf_rnn_forward(x, non_pad_mask, length, params):
    H = params["fw"]["w_hh"].shape[1]
    in_bw = reverse_padded_sequence(x, length)
    out_fw, out_bw = _bigru_pallas(x, in_bw, params, H)
    out_fw = non_pad_mask * out_fw
    # masking commutes with the length-aware reversal (valid<->valid, pads stay)
    out_bw = non_pad_mask * reverse_padded_sequence(out_bw, length)
    return jnp.concatenate([out_fw, out_bw], axis=-1)


# ----------------------------------------------------------------------------
# Parameter init (torch.nn.GRU default: U(-1/sqrt(hid), 1/sqrt(hid)))
# ----------------------------------------------------------------------------
def init_gru_params(key, in_dim, hid_dim):
    k = 1.0 / jnp.sqrt(jnp.float32(hid_dim))
    ks = jax.random.split(key, 4)
    return {
        "w_ih": jax.random.uniform(ks[0], (3 * hid_dim, in_dim), jnp.float32, -k, k),
        "w_hh": jax.random.uniform(ks[1], (3 * hid_dim, hid_dim), jnp.float32, -k, k),
        "b_ih": jax.random.uniform(ks[2], (3 * hid_dim,), jnp.float32, -k, k),
        "b_hh": jax.random.uniform(ks[3], (3 * hid_dim,), jnp.float32, -k, k),
    }


# ----------------------------------------------------------------------------
# Pure-JAX f32 reference (torch.nn.GRU semantics) for validation
# ----------------------------------------------------------------------------
def _gru_ref(x, p):
    H = p["w_hh"].shape[1]

    def step(h, x_t):
        gx = x_t @ p["w_ih"].T + p["b_ih"]
        gh = h @ p["w_hh"].T + p["b_hh"]
        r = jax.nn.sigmoid(gx[:, :H] + gh[:, :H])
        z = jax.nn.sigmoid(gx[:, H:2 * H] + gh[:, H:2 * H])
        n = jnp.tanh(gx[:, 2 * H:] + r * gh[:, 2 * H:])
        h_new = (1.0 - z) * n + z * h
        return h_new, h_new

    h0 = jnp.zeros((x.shape[0], H), jnp.float32)
    _, ys = jax.lax.scan(step, h0, jnp.transpose(x, (1, 0, 2)))
    return jnp.transpose(ys, (1, 0, 2))


def leaf_rnn_reference(x, non_pad_mask, length, params):
    out_fw = non_pad_mask * _gru_ref(x, params["fw"])
    in_bw = reverse_padded_sequence(x, length)
    out_bw = non_pad_mask * _gru_ref(in_bw, params["bw"])
    out_bw = reverse_padded_sequence(out_bw, length)
    return jnp.concatenate([out_fw, out_bw], axis=-1)


if __name__ == "__main__":
    B, T, D, H = 2, 8, 16, 32

    key = jax.random.PRNGKey(0)
    kx, kfw, kbw = jax.random.split(key, 3)

    x = jax.random.normal(kx, (B, T, D), dtype=jnp.float32)
    length = jnp.array([8, 5], dtype=jnp.int32)
    non_pad_mask = (jnp.arange(T)[None, :] < length[:, None]
                    ).astype(jnp.float32)[:, :, None]            # (B, T, 1)

    params = {
        "fw": init_gru_params(kfw, D, H),
        "bw": init_gru_params(kbw, D, H),
    }

    out = leaf_rnn_forward(x, non_pad_mask, length, params)
    out = jax.block_until_ready(out)
    assert out.shape == (B, T, 2 * H), out.shape

    ref = leaf_rnn_reference(x, non_pad_mask, length, params)
    err = float(jnp.max(jnp.abs(out - ref)))
    # bf16 MXU operands + bf16 gx scratch vs. a pure-f32 reference
    assert err < 5e-2, f"max abs err vs f32 reference: {err}"
    print("KERNEL_OK")
</pallas_src>

<mosaic_0001>
module attributes {stable_mosaic.version = 11 : i64} {
  func.func @_bigru_fused_kernel(%arg0: i32, %arg1: memref<8x16x128xbf16, #tpu.memory_space<vmem>>, %arg2: memref<128x384xbf16, #tpu.memory_space<vmem>>, %arg3: memref<128x384xbf16, #tpu.memory_space<vmem>>, %arg4: memref<1x384xf32, #tpu.memory_space<vmem>>, %arg5: memref<1x128xf32, #tpu.memory_space<vmem>>, %arg6: memref<8x16x128xf32, #tpu.memory_space<vmem>>, %arg7: memref<16x128xf32, #tpu.memory_space<vmem>>, %arg8: memref<8x16x384xbf16, #tpu.memory_space<vmem>>) attributes {dimension_semantics = [#tpu.dimension_semantics<arbitrary>], iteration_bounds = array<i64: 1>, scalar_prefetch = 0 : i64, scratch_operands = 2 : i64, tpu.core_type = #tpu.core_type<tc>, window_params = [{transform_indices = @transform_0, window_bounds = array<i64: 8, 16, 128>}, {pipeline_mode = #tpu.pipeline_mode<synchronous>, transform_indices = @transform_1, window_bounds = array<i64: 128, 384>}, {pipeline_mode = #tpu.pipeline_mode<synchronous>, transform_indices = @transform_2, window_bounds = array<i64: 128, 384>}, {pipeline_mode = #tpu.pipeline_mode<synchronous>, transform_indices = @transform_3, window_bounds = array<i64: 1, 384>}, {pipeline_mode = #tpu.pipeline_mode<synchronous>, transform_indices = @transform_4, window_bounds = array<i64: 1, 128>}, {transform_indices = @transform_5, window_bounds = array<i64: 8, 16, 128>}]} {
    %c0_i32 = arith.constant 0 : i32
    %0 = arith.cmpi eq, %arg0, %c0_i32 : i32
    %1 = arith.extui %0 : i1 to i32
    %c0_i32_0 = arith.constant 0 : i32
    %2 = arith.cmpi ne, %1, %c0_i32_0 : i32
    scf.if %2 {
      %cst_115 = arith.constant 0.000000e+00 : f32
      %347 = vector.broadcast %cst_115 : f32 to vector<16x128xf32>
      %c0_116 = arith.constant 0 : index
      %c0_117 = arith.constant 0 : index
      %348 = vector.load %arg7[%c0_116, %c0_117] : memref<16x128xf32, #tpu.memory_space<vmem>>, vector<16x128xf32>
      tpu.vector_store %arg7[%c0_116, %c0_117], %347 {strides = array<i32>} : memref<16x128xf32, #tpu.memory_space<vmem>>, vector<16x128xf32>,
    } else {
    }
    %c0 = arith.constant 0 : index
    %c0_1 = arith.constant 0 : index
    %c0_2 = arith.constant 0 : index
    %3 = vector.load %arg1[%c0, %c0_1, %c0_2] : memref<8x16x128xbf16, #tpu.memory_space<vmem>>, vector<8x16x128xbf16>
    %4 = vector.shape_cast %3 : vector<8x16x128xbf16> to vector<128x128xbf16>
    %c0_3 = arith.constant 0 : index
    %c0_4 = arith.constant 0 : index
    %5 = vector.load %arg2[%c0_3, %c0_4] : memref<128x384xbf16, #tpu.memory_space<vmem>>, vector<128x384xbf16>
    %cst = arith.constant dense<0.000000e+00> : vector<128x384xf32>
    %6 = tpu.matmul %4, %5, %cst {dimension_numbers = #tpu.dot_dimension_numbers<[1], [0], [0], [1], [0, 0, 1, 1], [], []>} : vector<128x128xbf16>, vector<128x384xbf16>, vector<128x384xf32> -> vector<128x384xf32>
    %c0_5 = arith.constant 0 : index
    %c0_6 = arith.constant 0 : index
    %7 = vector.load %arg4[%c0_5, %c0_6] : memref<1x384xf32, #tpu.memory_space<vmem>>, vector<1x384xf32>
    %8 = vector.broadcast %7 : vector<1x384xf32> to vector<128x384xf32>
    %9 = arith.addf %6, %8 : vector<128x384xf32>
    %10 = arith.truncf %9 : vector<128x384xf32> to vector<128x384xbf16>
    %11 = vector.shape_cast %10 : vector<128x384xbf16> to vector<8x16x384xbf16>
    %c0_7 = arith.constant 0 : index
    %c0_8 = arith.constant 0 : index
    %c0_9 = arith.constant 0 : index
    %12 = vector.load %arg8[%c0_7, %c0_8, %c0_9] : memref<8x16x384xbf16, #tpu.memory_space<vmem>>, vector<8x16x384xbf16>
    tpu.vector_store %arg8[%c0_7, %c0_8, %c0_9], %11 {strides = array<i32>} : memref<8x16x384xbf16, #tpu.memory_space<vmem>>, vector<8x16x384xbf16>,
    %c0_10 = arith.constant 0 : index
    %c0_11 = arith.constant 0 : index
    %13 = vector.load %arg3[%c0_10, %c0_11] : memref<128x384xbf16, #tpu.memory_space<vmem>>, vector<128x384xbf16>
    %c0_12 = arith.constant 0 : index
    %c0_13 = arith.constant 0 : index
    %14 = vector.load %arg5[%c0_12, %c0_13] : memref<1x128xf32, #tpu.memory_space<vmem>>, vector<1x128xf32>
    %15 = vector.shape_cast %14 : vector<1x128xf32> to vector<1x128xf32>
    %16 = vector.broadcast %15 : vector<1x128xf32> to vector<16x128xf32>
    %c0_14 = arith.constant 0 : index
    %c0_15 = arith.constant 0 : index
    %17 = vector.load %arg7[%c0_14, %c0_15] : memref<16x128xf32, #tpu.memory_space<vmem>>, vector<16x128xf32>
    %c0_i32_16 = arith.constant 0 : i32
    %18 = arith.index_cast %c0_i32_16 : i32 to index
    %c0_17 = arith.constant 0 : index
    %c0_18 = arith.constant 0 : index
    %19 = vector.load %arg8[%18, %c0_17, %c0_18] : memref<8x16x384xbf16, #tpu.memory_space<vmem>>, vector<1x16x384xbf16>
    %20 = vector.shape_cast %19 : vector<1x16x384xbf16> to vector<16x384xbf16>
    %21 = arith.extf %20 : vector<16x384xbf16> to vector<16x384xf32>
    %22 = arith.truncf %17 : vector<16x128xf32> to vector<16x128xbf16>
    %cst_19 = arith.constant dense<0.000000e+00> : vector<16x384xf32>
    %23 = tpu.matmul %22, %13, %cst_19 {dimension_numbers = #tpu.dot_dimension_numbers<[1], [0], [0], [1], [0, 0, 1, 1], [], []>} : vector<16x128xbf16>, vector<128x384xbf16>, vector<16x384xf32> -> vector<16x384xf32>
    %24 = vector.extract_strided_slice %21 {offsets = [0, 0], sizes = [16, 128], strides = [1, 1]} : vector<16x384xf32> to vector<16x128xf32>
    %25 = vector.extract_strided_slice %23 {offsets = [0, 0], sizes = [16, 128], strides = [1, 1]} : vector<16x384xf32> to vector<16x128xf32>
    %26 = arith.addf %24, %25 : vector<16x128xf32>
    %cst_20 = arith.constant 5.000000e-01 : f32
    %27 = vector.broadcast %cst_20 : f32 to vector<16x128xf32>
    %28 = arith.mulf %27, %26 : vector<16x128xf32>
    %29 = math.tanh %28 : vector<16x128xf32>
    %cst_21 = arith.constant 1.000000e+00 : f32
    %30 = vector.broadcast %cst_21 : f32 to vector<16x128xf32>
    %31 = arith.addf %29, %30 : vector<16x128xf32>
    %cst_22 = arith.constant 5.000000e-01 : f32
    %32 = vector.broadcast %cst_22 : f32 to vector<16x128xf32>
    %33 = arith.mulf %32, %31 : vector<16x128xf32>
    %34 = vector.extract_strided_slice %21 {offsets = [0, 128], sizes = [16, 128], strides = [1, 1]} : vector<16x384xf32> to vector<16x128xf32>
    %35 = vector.extract_strided_slice %23 {offsets = [0, 128], sizes = [16, 128], strides = [1, 1]} : vector<16x384xf32> to vector<16x128xf32>
    %36 = arith.addf %34, %35 : vector<16x128xf32>
    %cst_23 = arith.constant 5.000000e-01 : f32
    %37 = vector.broadcast %cst_23 : f32 to vector<16x128xf32>
    %38 = arith.mulf %37, %36 : vector<16x128xf32>
    %39 = math.tanh %38 : vector<16x128xf32>
    %cst_24 = arith.constant 1.000000e+00 : f32
    %40 = vector.broadcast %cst_24 : f32 to vector<16x128xf32>
    %41 = arith.addf %39, %40 : vector<16x128xf32>
    %cst_25 = arith.constant 5.000000e-01 : f32
    %42 = vector.broadcast %cst_25 : f32 to vector<16x128xf32>
    %43 = arith.mulf %42, %41 : vector<16x128xf32>
    %44 = vector.extract_strided_slice %21 {offsets = [0, 256], sizes = [16, 128], strides = [1, 1]} : vector<16x384xf32> to vector<16x128xf32>
    %45 = vector.extract_strided_slice %23 {offsets = [0, 256], sizes = [16, 128], strides = [1, 1]} : vector<16x384xf32> to vector<16x128xf32>
    %46 = arith.addf %45, %16 : vector<16x128xf32>
    %47 = arith.mulf %33, %46 : vector<16x128xf32>
    %48 = arith.addf %44, %47 : vector<16x128xf32>
    %49 = math.tanh %48 : vector<16x128xf32>
    %cst_26 = arith.constant 1.000000e+00 : f32
    %50 = vector.broadcast %cst_26 : f32 to vector<16x128xf32>
    %51 = arith.subf %50, %43 : vector<16x128xf32>
    %52 = arith.mulf %51, %49 : vector<16x128xf32>
    %53 = arith.mulf %43, %17 : vector<16x128xf32>
    %54 = arith.addf %52, %53 : vector<16x128xf32>
    %55 = arith.index_cast %c0_i32_16 : i32 to index
    %c0_27 = arith.constant 0 : index
    %c0_28 = arith.constant 0 : index
    %56 = vector.load %arg6[%55, %c0_27, %c0_28] : memref<8x16x128xf32, #tpu.memory_space<vmem>>, vector<1x16x128xf32>
    %57 = vector.shape_cast %56 : vector<1x16x128xf32> to vector<16x128xf32>
    %58 = vector.shape_cast %54 : vector<16x128xf32> to vector<1x16x128xf32>
    tpu.vector_store %arg6[%55, %c0_27, %c0_28], %58 {strides = array<i32>} : memref<8x16x128xf32, #tpu.memory_space<vmem>>, vector<1x16x128xf32>,
    %c1_i32 = arith.constant 1 : i32
    %59 = arith.index_cast %c1_i32 : i32 to index
    %c0_29 = arith.constant 0 : index
    %c0_30 = arith.constant 0 : index
    %60 = vector.load %arg8[%59, %c0_29, %c0_30] : memref<8x16x384xbf16, #tpu.memory_space<vmem>>, vector<1x16x384xbf16>
    %61 = vector.shape_cast %60 : vector<1x16x384xbf16> to vector<16x384xbf16>
    %62 = arith.extf %61 : vector<16x384xbf16> to vector<16x384xf32>
    %63 = arith.truncf %54 : vector<16x128xf32> to vector<16x128xbf16>
    %cst_31 = arith.constant dense<0.000000e+00> : vector<16x384xf32>
    %64 = tpu.matmul %63, %13, %cst_31 {dimension_numbers = #tpu.dot_dimension_numbers<[1], [0], [0], [1], [0, 0, 1, 1], [], []>} : vector<16x128xbf16>, vector<128x384xbf16>, vector<16x384xf32> -> vector<16x384xf32>
    %65 = vector.extract_strided_slice %62 {offsets = [0, 0], sizes = [16, 128], strides = [1, 1]} : vector<16x384xf32> to vector<16x128xf32>
    %66 = vector.extract_strided_slice %64 {offsets = [0, 0], sizes = [16, 128], strides = [1, 1]} : vector<16x384xf32> to vector<16x128xf32>
    %67 = arith.addf %65, %66 : vector<16x128xf32>
    %cst_32 = arith.constant 5.000000e-01 : f32
    %68 = vector.broadcast %cst_32 : f32 to vector<16x128xf32>
    %69 = arith.mulf %68, %67 : vector<16x128xf32>
    %70 = math.tanh %69 : vector<16x128xf32>
    %cst_33 = arith.constant 1.000000e+00 : f32
    %71 = vector.broadcast %cst_33 : f32 to vector<16x128xf32>
    %72 = arith.addf %70, %71 : vector<16x128xf32>
    %cst_34 = arith.constant 5.000000e-01 : f32
    %73 = vector.broadcast %cst_34 : f32 to vector<16x128xf32>
    %74 = arith.mulf %73, %72 : vector<16x128xf32>
    %75 = vector.extract_strided_slice %62 {offsets = [0, 128], sizes = [16, 128], strides = [1, 1]} : vector<16x384xf32> to vector<16x128xf32>
    %76 = vector.extract_strided_slice %64 {offsets = [0, 128], sizes = [16, 128], strides = [1, 1]} : vector<16x384xf32> to vector<16x128xf32>
    %77 = arith.addf %75, %76 : vector<16x128xf32>
    %cst_35 = arith.constant 5.000000e-01 : f32
    %78 = vector.broadcast %cst_35 : f32 to vector<16x128xf32>
    %79 = arith.mulf %78, %77 : vector<16x128xf32>
    %80 = math.tanh %79 : vector<16x128xf32>
    %cst_36 = arith.constant 1.000000e+00 : f32
    %81 = vector.broadcast %cst_36 : f32 to vector<16x128xf32>
    %82 = arith.addf %80, %81 : vector<16x128xf32>
    %cst_37 = arith.constant 5.000000e-01 : f32
    %83 = vector.broadcast %cst_37 : f32 to vector<16x128xf32>
    %84 = arith.mulf %83, %82 : vector<16x128xf32>
    %85 = vector.extract_strided_slice %62 {offsets = [0, 256], sizes = [16, 128], strides = [1, 1]} : vector<16x384xf32> to vector<16x128xf32>
    %86 = vector.extract_strided_slice %64 {offsets = [0, 256], sizes = [16, 128], strides = [1, 1]} : vector<16x384xf32> to vector<16x128xf32>
    %87 = arith.addf %86, %16 : vector<16x128xf32>
    %88 = arith.mulf %74, %87 : vector<16x128xf32>
    %89 = arith.addf %85, %88 : vector<16x128xf32>
    %90 = math.tanh %89 : vector<16x128xf32>
    %cst_38 = arith.constant 1.000000e+00 : f32
    %91 = vector.broadcast %cst_38 : f32 to vector<16x128xf32>
    %92 = arith.subf %91, %84 : vector<16x128xf32>
    %93 = arith.mulf %92, %90 : vector<16x128xf32>
    %94 = arith.mulf %84, %54 : vector<16x128xf32>
    %95 = arith.addf %93, %94 : vector<16x128xf32>
    %96 = arith.index_cast %c1_i32 : i32 to index
    %c0_39 = arith.constant 0 : index
    %c0_40 = arith.constant 0 : index
    %97 = vector.load %arg6[%96, %c0_39, %c0_40] : memref<8x16x128xf32, #tpu.memory_space<vmem>>, vector<1x16x128xf32>
    %98 = vector.shape_cast %97 : vector<1x16x128xf32> to vector<16x128xf32>
    %99 = vector.shape_cast %95 : vector<16x128xf32> to vector<1x16x128xf32>
    tpu.vector_store %arg6[%96, %c0_39, %c0_40], %99 {strides = array<i32>} : memref<8x16x128xf32, #tpu.memory_space<vmem>>, vector<1x16x128xf32>,
    %c2_i32 = arith.constant 2 : i32
    %100 = arith.index_cast %c2_i32 : i32 to index
    %c0_41 = arith.constant 0 : index
    %c0_42 = arith.constant 0 : index
    %101 = vector.load %arg8[%100, %c0_41, %c0_42] : memref<8x16x384xbf16, #tpu.memory_space<vmem>>, vector<1x16x384xbf16>
    %102 = vector.shape_cast %101 : vector<1x16x384xbf16> to vector<16x384xbf16>
    %103 = arith.extf %102 : vector<16x384xbf16> to vector<16x384xf32>
    %104 = arith.truncf %95 : vector<16x128xf32> to vector<16x128xbf16>
    %cst_43 = arith.constant dense<0.000000e+00> : vector<16x384xf32>
    %105 = tpu.matmul %104, %13, %cst_43 {dimension_numbers = #tpu.dot_dimension_numbers<[1], [0], [0], [1], [0, 0, 1, 1], [], []>} : vector<16x128xbf16>, vector<128x384xbf16>, vector<16x384xf32> -> vector<16x384xf32>
    %106 = vector.extract_strided_slice %103 {offsets = [0, 0], sizes = [16, 128], strides = [1, 1]} : vector<16x384xf32> to vector<16x128xf32>
    %107 = vector.extract_strided_slice %105 {offsets = [0, 0], sizes = [16, 128], strides = [1, 1]} : vector<16x384xf32> to vector<16x128xf32>
    %108 = arith.addf %106, %107 : vector<16x128xf32>
    %cst_44 = arith.constant 5.000000e-01 : f32
    %109 = vector.broadcast %cst_44 : f32 to vector<16x128xf32>
    %110 = arith.mulf %109, %108 : vector<16x128xf32>
    %111 = math.tanh %110 : vector<16x128xf32>
    %cst_45 = arith.constant 1.000000e+00 : f32
    %112 = vector.broadcast %cst_45 : f32 to vector<16x128xf32>
    %113 = arith.addf %111, %112 : vector<16x128xf32>
    %cst_46 = arith.constant 5.000000e-01 : f32
    %114 = vector.broadcast %cst_46 : f32 to vector<16x128xf32>
    %115 = arith.mulf %114, %113 : vector<16x128xf32>
    %116 = vector.extract_strided_slice %103 {offsets = [0, 128], sizes = [16, 128], strides = [1, 1]} : vector<16x384xf32> to vector<16x128xf32>
    %117 = vector.extract_strided_slice %105 {offsets = [0, 128], sizes = [16, 128], strides = [1, 1]} : vector<16x384xf32> to vector<16x128xf32>
    %118 = arith.addf %116, %117 : vector<16x128xf32>
    %cst_47 = arith.constant 5.000000e-01 : f32
    %119 = vector.broadcast %cst_47 : f32 to vector<16x128xf32>
    %120 = arith.mulf %119, %118 : vector<16x128xf32>
    %121 = math.tanh %120 : vector<16x128xf32>
    %cst_48 = arith.constant 1.000000e+00 : f32
    %122 = vector.broadcast %cst_48 : f32 to vector<16x128xf32>
    %123 = arith.addf %121, %122 : vector<16x128xf32>
    %cst_49 = arith.constant 5.000000e-01 : f32
    %124 = vector.broadcast %cst_49 : f32 to vector<16x128xf32>
    %125 = arith.mulf %124, %123 : vector<16x128xf32>
    %126 = vector.extract_strided_slice %103 {offsets = [0, 256], sizes = [16, 128], strides = [1, 1]} : vector<16x384xf32> to vector<16x128xf32>
    %127 = vector.extract_strided_slice %105 {offsets = [0, 256], sizes = [16, 128], strides = [1, 1]} : vector<16x384xf32> to vector<16x128xf32>
    %128 = arith.addf %127, %16 : vector<16x128xf32>
    %129 = arith.mulf %115, %128 : vector<16x128xf32>
    %130 = arith.addf %126, %129 : vector<16x128xf32>
    %131 = math.tanh %130 : vector<16x128xf32>
    %cst_50 = arith.constant 1.000000e+00 : f32
    %132 = vector.broadcast %cst_50 : f32 to vector<16x128xf32>
    %133 = arith.subf %132, %125 : vector<16x128xf32>
    %134 = arith.mulf %133, %131 : vector<16x128xf32>
    %135 = arith.mulf %125, %95 : vector<16x128xf32>
    %136 = arith.addf %134, %135 : vector<16x128xf32>
    %137 = arith.index_cast %c2_i32 : i32 to index
    %c0_51 = arith.constant 0 : index
    %c0_52 = arith.constant 0 : index
    %138 = vector.load %arg6[%137, %c0_51, %c0_52] : memref<8x16x128xf32, #tpu.memory_space<vmem>>, vector<1x16x128xf32>
    %139 = vector.shape_cast %138 : vector<1x16x128xf32> to vector<16x128xf32>
    %140 = vector.shape_cast %136 : vector<16x128xf32> to vector<1x16x128xf32>
    tpu.vector_store %arg6[%137, %c0_51, %c0_52], %140 {strides = array<i32>} : memref<8x16x128xf32, #tpu.memory_space<vmem>>, vector<1x16x128xf32>,
    %c3_i32 = arith.constant 3 : i32
    %141 = arith.index_cast %c3_i32 : i32 to index
    %c0_53 = arith.constant 0 : index
    %c0_54 = arith.constant 0 : index
    %142 = vector.load %arg8[%141, %c0_53, %c0_54] : memref<8x16x384xbf16, #tpu.memory_space<vmem>>, vector<1x16x384xbf16>
    %143 = vector.shape_cast %142 : vector<1x16x384xbf16> to vector<16x384xbf16>
    %144 = arith.extf %143 : vector<16x384xbf16> to vector<16x384xf32>
    %145 = arith.truncf %136 : vector<16x128xf32> to vector<16x128xbf16>
    %cst_55 = arith.constant dense<0.000000e+00> : vector<16x384xf32>
    %146 = tpu.matmul %145, %13, %cst_55 {dimension_numbers = #tpu.dot_dimension_numbers<[1], [0], [0], [1], [0, 0, 1, 1], [], []>} : vector<16x128xbf16>, vector<128x384xbf16>, vector<16x384xf32> -> vector<16x384xf32>
    %147 = vector.extract_strided_slice %144 {offsets = [0, 0], sizes = [16, 128], strides = [1, 1]} : vector<16x384xf32> to vector<16x128xf32>
    %148 = vector.extract_strided_slice %146 {offsets = [0, 0], sizes = [16, 128], strides = [1, 1]} : vector<16x384xf32> to vector<16x128xf32>
    %149 = arith.addf %147, %148 : vector<16x128xf32>
    %cst_56 = arith.constant 5.000000e-01 : f32
    %150 = vector.broadcast %cst_56 : f32 to vector<16x128xf32>
    %151 = arith.mulf %150, %149 : vector<16x128xf32>
    %152 = math.tanh %151 : vector<16x128xf32>
    %cst_57 = arith.constant 1.000000e+00 : f32
    %153 = vector.broadcast %cst_57 : f32 to vector<16x128xf32>
    %154 = arith.addf %152, %153 : vector<16x128xf32>
    %cst_58 = arith.constant 5.000000e-01 : f32
    %155 = vector.broadcast %cst_58 : f32 to vector<16x128xf32>
    %156 = arith.mulf %155, %154 : vector<16x128xf32>
    %157 = vector.extract_strided_slice %144 {offsets = [0, 128], sizes = [16, 128], strides = [1, 1]} : vector<16x384xf32> to vector<16x128xf32>
    %158 = vector.extract_strided_slice %146 {offsets = [0, 128], sizes = [16, 128], strides = [1, 1]} : vector<16x384xf32> to vector<16x128xf32>
    %159 = arith.addf %157, %158 : vector<16x128xf32>
    %cst_59 = arith.constant 5.000000e-01 : f32
    %160 = vector.broadcast %cst_59 : f32 to vector<16x128xf32>
    %161 = arith.mulf %160, %159 : vector<16x128xf32>
    %162 = math.tanh %161 : vector<16x128xf32>
    %cst_60 = arith.constant 1.000000e+00 : f32
    %163 = vector.broadcast %cst_60 : f32 to vector<16x128xf32>
    %164 = arith.addf %162, %163 : vector<16x128xf32>
    %cst_61 = arith.constant 5.000000e-01 : f32
    %165 = vector.broadcast %cst_61 : f32 to vector<16x128xf32>
    %166 = arith.mulf %165, %164 : vector<16x128xf32>
    %167 = vector.extract_strided_slice %144 {offsets = [0, 256], sizes = [16, 128], strides = [1, 1]} : vector<16x384xf32> to vector<16x128xf32>
    %168 = vector.extract_strided_slice %146 {offsets = [0, 256], sizes = [16, 128], strides = [1, 1]} : vector<16x384xf32> to vector<16x128xf32>
    %169 = arith.addf %168, %16 : vector<16x128xf32>
    %170 = arith.mulf %156, %169 : vector<16x128xf32>
    %171 = arith.addf %167, %170 : vector<16x128xf32>
    %172 = math.tanh %171 : vector<16x128xf32>
    %cst_62 = arith.constant 1.000000e+00 : f32
    %173 = vector.broadcast %cst_62 : f32 to vector<16x128xf32>
    %174 = arith.subf %173, %166 : vector<16x128xf32>
    %175 = arith.mulf %174, %172 : vector<16x128xf32>
    %176 = arith.mulf %166, %136 : vector<16x128xf32>
    %177 = arith.addf %175, %176 : vector<16x128xf32>
    %178 = arith.index_cast %c3_i32 : i32 to index
    %c0_63 = arith.constant 0 : index
    %c0_64 = arith.constant 0 : index
    %179 = vector.load %arg6[%178, %c0_63, %c0_64] : memref<8x16x128xf32, #tpu.memory_space<vmem>>, vector<1x16x128xf32>
    %180 = vector.shape_cast %179 : vector<1x16x128xf32> to vector<16x128xf32>
    %181 = vector.shape_cast %177 : vector<16x128xf32> to vector<1x16x128xf32>
    tpu.vector_store %arg6[%178, %c0_63, %c0_64], %181 {strides = array<i32>} : memref<8x16x128xf32, #tpu.memory_space<vmem>>, vector<1x16x128xf32>,
    %c4_i32 = arith.constant 4 : i32
    %182 = arith.index_cast %c4_i32 : i32 to index
    %c0_65 = arith.constant 0 : index
    %c0_66 = arith.constant 0 : index
    %183 = vector.load %arg8[%182, %c0_65, %c0_66] : memref<8x16x384xbf16, #tpu.memory_space<vmem>>, vector<1x16x384xbf16>
    %184 = vector.shape_cast %183 : vector<1x16x384xbf16> to vector<16x384xbf16>
    %185 = arith.extf %184 : vector<16x384xbf16> to vector<16x384xf32>
    %186 = arith.truncf %177 : vector<16x128xf32> to vector<16x128xbf16>
    %cst_67 = arith.constant dense<0.000000e+00> : vector<16x384xf32>
    %187 = tpu.matmul %186, %13, %cst_67 {dimension_numbers = #tpu.dot_dimension_numbers<[1], [0], [0], [1], [0, 0, 1, 1], [], []>} : vector<16x128xbf16>, vector<128x384xbf16>, vector<16x384xf32> -> vector<16x384xf32>
    %188 = vector.extract_strided_slice %185 {offsets = [0, 0], sizes = [16, 128], strides = [1, 1]} : vector<16x384xf32> to vector<16x128xf32>
    %189 = vector.extract_strided_slice %187 {offsets = [0, 0], sizes = [16, 128], strides = [1, 1]} : vector<16x384xf32> to vector<16x128xf32>
    %190 = arith.addf %188, %189 : vector<16x128xf32>
    %cst_68 = arith.constant 5.000000e-01 : f32
    %191 = vector.broadcast %cst_68 : f32 to vector<16x128xf32>
    %192 = arith.mulf %191, %190 : vector<16x128xf32>
    %193 = math.tanh %192 : vector<16x128xf32>
    %cst_69 = arith.constant 1.000000e+00 : f32
    %194 = vector.broadcast %cst_69 : f32 to vector<16x128xf32>
    %195 = arith.addf %193, %194 : vector<16x128xf32>
    %cst_70 = arith.constant 5.000000e-01 : f32
    %196 = vector.broadcast %cst_70 : f32 to vector<16x128xf32>
    %197 = arith.mulf %196, %195 : vector<16x128xf32>
    %198 = vector.extract_strided_slice %185 {offsets = [0, 128], sizes = [16, 128], strides = [1, 1]} : vector<16x384xf32> to vector<16x128xf32>
    %199 = vector.extract_strided_slice %187 {offsets = [0, 128], sizes = [16, 128], strides = [1, 1]} : vector<16x384xf32> to vector<16x128xf32>
    %200 = arith.addf %198, %199 : vector<16x128xf32>
    %cst_71 = arith.constant 5.000000e-01 : f32
    %201 = vector.broadcast %cst_71 : f32 to vector<16x128xf32>
    %202 = arith.mulf %201, %200 : vector<16x128xf32>
    %203 = math.tanh %202 : vector<16x128xf32>
    %cst_72 = arith.constant 1.000000e+00 : f32
    %204 = vector.broadcast %cst_72 : f32 to vector<16x128xf32>
    %205 = arith.addf %203, %204 : vector<16x128xf32>
    %cst_73 = arith.constant 5.000000e-01 : f32
    %206 = vector.broadcast %cst_73 : f32 to vector<16x128xf32>
    %207 = arith.mulf %206, %205 : vector<16x128xf32>
    %208 = vector.extract_strided_slice %185 {offsets = [0, 256], sizes = [16, 128], strides = [1, 1]} : vector<16x384xf32> to vector<16x128xf32>
    %209 = vector.extract_strided_slice %187 {offsets = [0, 256], sizes = [16, 128], strides = [1, 1]} : vector<16x384xf32> to vector<16x128xf32>
    %210 = arith.addf %209, %16 : vector<16x128xf32>
    %211 = arith.mulf %197, %210 : vector<16x128xf32>
    %212 = arith.addf %208, %211 : vector<16x128xf32>
    %213 = math.tanh %212 : vector<16x128xf32>
    %cst_74 = arith.constant 1.000000e+00 : f32
    %214 = vector.broadcast %cst_74 : f32 to vector<16x128xf32>
    %215 = arith.subf %214, %207 : vector<16x128xf32>
    %216 = arith.mulf %215, %213 : vector<16x128xf32>
    %217 = arith.mulf %207, %177 : vector<16x128xf32>
    %218 = arith.addf %216, %217 : vector<16x128xf32>
    %219 = arith.index_cast %c4_i32 : i32 to index
    %c0_75 = arith.constant 0 : index
    %c0_76 = arith.constant 0 : index
    %220 = vector.load %arg6[%219, %c0_75, %c0_76] : memref<8x16x128xf32, #tpu.memory_space<vmem>>, vector<1x16x128xf32>
    %221 = vector.shape_cast %220 : vector<1x16x128xf32> to vector<16x128xf32>
    %222 = vector.shape_cast %218 : vector<16x128xf32> to vector<1x16x128xf32>
    tpu.vector_store %arg6[%219, %c0_75, %c0_76], %222 {strides = array<i32>} : memref<8x16x128xf32, #tpu.memory_space<vmem>>, vector<1x16x128xf32>,
    %c5_i32 = arith.constant 5 : i32
    %223 = arith.index_cast %c5_i32 : i32 to index
    %c0_77 = arith.constant 0 : index
    %c0_78 = arith.constant 0 : index
    %224 = vector.load %arg8[%223, %c0_77, %c0_78] : memref<8x16x384xbf16, #tpu.memory_space<vmem>>, vector<1x16x384xbf16>
    %225 = vector.shape_cast %224 : vector<1x16x384xbf16> to vector<16x384xbf16>
    %226 = arith.extf %225 : vector<16x384xbf16> to vector<16x384xf32>
    %227 = arith.truncf %218 : vector<16x128xf32> to vector<16x128xbf16>
    %cst_79 = arith.constant dense<0.000000e+00> : vector<16x384xf32>
    %228 = tpu.matmul %227, %13, %cst_79 {dimension_numbers = #tpu.dot_dimension_numbers<[1], [0], [0], [1], [0, 0, 1, 1], [], []>} : vector<16x128xbf16>, vector<128x384xbf16>, vector<16x384xf32> -> vector<16x384xf32>
    %229 = vector.extract_strided_slice %226 {offsets = [0, 0], sizes = [16, 128], strides = [1, 1]} : vector<16x384xf32> to vector<16x128xf32>
    %230 = vector.extract_strided_slice %228 {offsets = [0, 0], sizes = [16, 128], strides = [1, 1]} : vector<16x384xf32> to vector<16x128xf32>
    %231 = arith.addf %229, %230 : vector<16x128xf32>
    %cst_80 = arith.constant 5.000000e-01 : f32
    %232 = vector.broadcast %cst_80 : f32 to vector<16x128xf32>
    %233 = arith.mulf %232, %231 : vector<16x128xf32>
    %234 = math.tanh %233 : vector<16x128xf32>
    %cst_81 = arith.constant 1.000000e+00 : f32
    %235 = vector.broadcast %cst_81 : f32 to vector<16x128xf32>
    %236 = arith.addf %234, %235 : vector<16x128xf32>
    %cst_82 = arith.constant 5.000000e-01 : f32
    %237 = vector.broadcast %cst_82 : f32 to vector<16x128xf32>
    %238 = arith.mulf %237, %236 : vector<16x128xf32>
    %239 = vector.extract_strided_slice %226 {offsets = [0, 128], sizes = [16, 128], strides = [1, 1]} : vector<16x384xf32> to vector<16x128xf32>
    %240 = vector.extract_strided_slice %228 {offsets = [0, 128], sizes = [16, 128], strides = [1, 1]} : vector<16x384xf32> to vector<16x128xf32>
    %241 = arith.addf %239, %240 : vector<16x128xf32>
    %cst_83 = arith.constant 5.000000e-01 : f32
    %242 = vector.broadcast %cst_83 : f32 to vector<16x128xf32>
    %243 = arith.mulf %242, %241 : vector<16x128xf32>
    %244 = math.tanh %243 : vector<16x128xf32>
    %cst_84 = arith.constant 1.000000e+00 : f32
    %245 = vector.broadcast %cst_84 : f32 to vector<16x128xf32>
    %246 = arith.addf %244, %245 : vector<16x128xf32>
    %cst_85 = arith.constant 5.000000e-01 : f32
    %247 = vector.broadcast %cst_85 : f32 to vector<16x128xf32>
    %248 = arith.mulf %247, %246 : vector<16x128xf32>
    %249 = vector.extract_strided_slice %226 {offsets = [0, 256], sizes = [16, 128], strides = [1, 1]} : vector<16x384xf32> to vector<16x128xf32>
    %250 = vector.extract_strided_slice %228 {offsets = [0, 256], sizes = [16, 128], strides = [1, 1]} : vector<16x384xf32> to vector<16x128xf32>
    %251 = arith.addf %250, %16 : vector<16x128xf32>
    %252 = arith.mulf %238, %251 : vector<16x128xf32>
    %253 = arith.addf %249, %252 : vector<16x128xf32>
    %254 = math.tanh %253 : vector<16x128xf32>
    %cst_86 = arith.constant 1.000000e+00 : f32
    %255 = vector.broadcast %cst_86 : f32 to vector<16x128xf32>
    %256 = arith.subf %255, %248 : vector<16x128xf32>
    %257 = arith.mulf %256, %254 : vector<16x128xf32>
    %258 = arith.mulf %248, %218 : vector<16x128xf32>
    %259 = arith.addf %257, %258 : vector<16x128xf32>
    %260 = arith.index_cast %c5_i32 : i32 to index
    %c0_87 = arith.constant 0 : index
    %c0_88 = arith.constant 0 : index
    %261 = vector.load %arg6[%260, %c0_87, %c0_88] : memref<8x16x128xf32, #tpu.memory_space<vmem>>, vector<1x16x128xf32>
    %262 = vector.shape_cast %261 : vector<1x16x128xf32> to vector<16x128xf32>
    %263 = vector.shape_cast %259 : vector<16x128xf32> to vector<1x16x128xf32>
    tpu.vector_store %arg6[%260, %c0_87, %c0_88], %263 {strides = array<i32>} : memref<8x16x128xf32, #tpu.memory_space<vmem>>, vector<1x16x128xf32>,
    %c6_i32 = arith.constant 6 : i32
    %264 = arith.index_cast %c6_i32 : i32 to index
    %c0_89 = arith.constant 0 : index
    %c0_90 = arith.constant 0 : index
    %265 = vector.load %arg8[%264, %c0_89, %c0_90] : memref<8x16x384xbf16, #tpu.memory_space<vmem>>, vector<1x16x384xbf16>
    %266 = vector.shape_cast %265 : vector<1x16x384xbf16> to vector<16x384xbf16>
    %267 = arith.extf %266 : vector<16x384xbf16> to vector<16x384xf32>
    %268 = arith.truncf %259 : vector<16x128xf32> to vector<16x128xbf16>
    %cst_91 = arith.constant dense<0.000000e+00> : vector<16x384xf32>
    %269 = tpu.matmul %268, %13, %cst_91 {dimension_numbers = #tpu.dot_dimension_numbers<[1], [0], [0], [1], [0, 0, 1, 1], [], []>} : vector<16x128xbf16>, vector<128x384xbf16>, vector<16x384xf32> -> vector<16x384xf32>
    %270 = vector.extract_strided_slice %267 {offsets = [0, 0], sizes = [16, 128], strides = [1, 1]} : vector<16x384xf32> to vector<16x128xf32>
    %271 = vector.extract_strided_slice %269 {offsets = [0, 0], sizes = [16, 128], strides = [1, 1]} : vector<16x384xf32> to vector<16x128xf32>
    %272 = arith.addf %270, %271 : vector<16x128xf32>
    %cst_92 = arith.constant 5.000000e-01 : f32
    %273 = vector.broadcast %cst_92 : f32 to vector<16x128xf32>
    %274 = arith.mulf %273, %272 : vector<16x128xf32>
    %275 = math.tanh %274 : vector<16x128xf32>
    %cst_93 = arith.constant 1.000000e+00 : f32
    %276 = vector.broadcast %cst_93 : f32 to vector<16x128xf32>
    %277 = arith.addf %275, %276 : vector<16x128xf32>
    %cst_94 = arith.constant 5.000000e-01 : f32
    %278 = vector.broadcast %cst_94 : f32 to vector<16x128xf32>
    %279 = arith.mulf %278, %277 : vector<16x128xf32>
    %280 = vector.extract_strided_slice %267 {offsets = [0, 128], sizes = [16, 128], strides = [1, 1]} : vector<16x384xf32> to vector<16x128xf32>
    %281 = vector.extract_strided_slice %269 {offsets = [0, 128], sizes = [16, 128], strides = [1, 1]} : vector<16x384xf32> to vector<16x128xf32>
    %282 = arith.addf %280, %281 : vector<16x128xf32>
    %cst_95 = arith.constant 5.000000e-01 : f32
    %283 = vector.broadcast %cst_95 : f32 to vector<16x128xf32>
    %284 = arith.mulf %283, %282 : vector<16x128xf32>
    %285 = math.tanh %284 : vector<16x128xf32>
    %cst_96 = arith.constant 1.000000e+00 : f32
    %286 = vector.broadcast %cst_96 : f32 to vector<16x128xf32>
    %287 = arith.addf %285, %286 : vector<16x128xf32>
    %cst_97 = arith.constant 5.000000e-01 : f32
    %288 = vector.broadcast %cst_97 : f32 to vector<16x128xf32>
    %289 = arith.mulf %288, %287 : vector<16x128xf32>
    %290 = vector.extract_strided_slice %267 {offsets = [0, 256], sizes = [16, 128], strides = [1, 1]} : vector<16x384xf32> to vector<16x128xf32>
    %291 = vector.extract_strided_slice %269 {offsets = [0, 256], sizes = [16, 128], strides = [1, 1]} : vector<16x384xf32> to vector<16x128xf32>
    %292 = arith.addf %291, %16 : vector<16x128xf32>
    %293 = arith.mulf %279, %292 : vector<16x128xf32>
    %294 = arith.addf %290, %293 : vector<16x128xf32>
    %295 = math.tanh %294 : vector<16x128xf32>
    %cst_98 = arith.constant 1.000000e+00 : f32
    %296 = vector.broadcast %cst_98 : f32 to vector<16x128xf32>
    %297 = arith.subf %296, %289 : vector<16x128xf32>
    %298 = arith.mulf %297, %295 : vector<16x128xf32>
    %299 = arith.mulf %289, %259 : vector<16x128xf32>
    %300 = arith.addf %298, %299 : vector<16x128xf32>
    %301 = arith.index_cast %c6_i32 : i32 to index
    %c0_99 = arith.constant 0 : index
    %c0_100 = arith.constant 0 : index
    %302 = vector.load %arg6[%301, %c0_99, %c0_100] : memref<8x16x128xf32, #tpu.memory_space<vmem>>, vector<1x16x128xf32>
    %303 = vector.shape_cast %302 : vector<1x16x128xf32> to vector<16x128xf32>
    %304 = vector.shape_cast %300 : vector<16x128xf32> to vector<1x16x128xf32>
    tpu.vector_store %arg6[%301, %c0_99, %c0_100], %304 {strides = array<i32>} : memref<8x16x128xf32, #tpu.memory_space<vmem>>, vector<1x16x128xf32>,
    %c7_i32 = arith.constant 7 : i32
    %305 = arith.index_cast %c7_i32 : i32 to index
    %c0_101 = arith.constant 0 : index
    %c0_102 = arith.constant 0 : index
    %306 = vector.load %arg8[%305, %c0_101, %c0_102] : memref<8x16x384xbf16, #tpu.memory_space<vmem>>, vector<1x16x384xbf16>
    %307 = vector.shape_cast %306 : vector<1x16x384xbf16> to vector<16x384xbf16>
    %308 = arith.extf %307 : vector<16x384xbf16> to vector<16x384xf32>
    %309 = arith.truncf %300 : vector<16x128xf32> to vector<16x128xbf16>
    %cst_103 = arith.constant dense<0.000000e+00> : vector<16x384xf32>
    %310 = tpu.matmul %309, %13, %cst_103 {dimension_numbers = #tpu.dot_dimension_numbers<[1], [0], [0], [1], [0, 0, 1, 1], [], []>} : vector<16x128xbf16>, vector<128x384xbf16>, vector<16x384xf32> -> vector<16x384xf32>
    %311 = vector.extract_strided_slice %308 {offsets = [0, 0], sizes = [16, 128], strides = [1, 1]} : vector<16x384xf32> to vector<16x128xf32>
    %312 = vector.extract_strided_slice %310 {offsets = [0, 0], sizes = [16, 128], strides = [1, 1]} : vector<16x384xf32> to vector<16x128xf32>
    %313 = arith.addf %311, %312 : vector<16x128xf32>
    %cst_104 = arith.constant 5.000000e-01 : f32
    %314 = vector.broadcast %cst_104 : f32 to vector<16x128xf32>
    %315 = arith.mulf %314, %313 : vector<16x128xf32>
    %316 = math.tanh %315 : vector<16x128xf32>
    %cst_105 = arith.constant 1.000000e+00 : f32
    %317 = vector.broadcast %cst_105 : f32 to vector<16x128xf32>
    %318 = arith.addf %316, %317 : vector<16x128xf32>
    %cst_106 = arith.constant 5.000000e-01 : f32
    %319 = vector.broadcast %cst_106 : f32 to vector<16x128xf32>
    %320 = arith.mulf %319, %318 : vector<16x128xf32>
    %321 = vector.extract_strided_slice %308 {offsets = [0, 128], sizes = [16, 128], strides = [1, 1]} : vector<16x384xf32> to vector<16x128xf32>
    %322 = vector.extract_strided_slice %310 {offsets = [0, 128], sizes = [16, 128], strides = [1, 1]} : vector<16x384xf32> to vector<16x128xf32>
    %323 = arith.addf %321, %322 : vector<16x128xf32>
    %cst_107 = arith.constant 5.000000e-01 : f32
    %324 = vector.broadcast %cst_107 : f32 to vector<16x128xf32>
    %325 = arith.mulf %324, %323 : vector<16x128xf32>
    %326 = math.tanh %325 : vector<16x128xf32>
    %cst_108 = arith.constant 1.000000e+00 : f32
    %327 = vector.broadcast %cst_108 : f32 to vector<16x128xf32>
    %328 = arith.addf %326, %327 : vector<16x128xf32>
    %cst_109 = arith.constant 5.000000e-01 : f32
    %329 = vector.broadcast %cst_109 : f32 to vector<16x128xf32>
    %330 = arith.mulf %329, %328 : vector<16x128xf32>
    %331 = vector.extract_strided_slice %308 {offsets = [0, 256], sizes = [16, 128], strides = [1, 1]} : vector<16x384xf32> to vector<16x128xf32>
    %332 = vector.extract_strided_slice %310 {offsets = [0, 256], sizes = [16, 128], strides = [1, 1]} : vector<16x384xf32> to vector<16x128xf32>
    %333 = arith.addf %332, %16 : vector<16x128xf32>
    %334 = arith.mulf %320, %333 : vector<16x128xf32>
    %335 = arith.addf %331, %334 : vector<16x128xf32>
    %336 = math.tanh %335 : vector<16x128xf32>
    %cst_110 = arith.constant 1.000000e+00 : f32
    %337 = vector.broadcast %cst_110 : f32 to vector<16x128xf32>
    %338 = arith.subf %337, %330 : vector<16x128xf32>
    %339 = arith.mulf %338, %336 : vector<16x128xf32>
    %340 = arith.mulf %330, %300 : vector<16x128xf32>
    %341 = arith.addf %339, %340 : vector<16x128xf32>
    %342 = arith.index_cast %c7_i32 : i32 to index
    %c0_111 = arith.constant 0 : index
    %c0_112 = arith.constant 0 : index
    %343 = vector.load %arg6[%342, %c0_111, %c0_112] : memref<8x16x128xf32, #tpu.memory_space<vmem>>, vector<1x16x128xf32>
    %344 = vector.shape_cast %343 : vector<1x16x128xf32> to vector<16x128xf32>
    %345 = vector.shape_cast %341 : vector<16x128xf32> to vector<1x16x128xf32>
    tpu.vector_store %arg6[%342, %c0_111, %c0_112], %345 {strides = array<i32>} : memref<8x16x128xf32, #tpu.memory_space<vmem>>, vector<1x16x128xf32>,
    %c8_i32 = arith.constant 8 : i32
    %c0_113 = arith.constant 0 : index
    %c0_114 = arith.constant 0 : index
    %346 = vector.load %arg7[%c0_113, %c0_114] : memref<16x128xf32, #tpu.memory_space<vmem>>, vector<16x128xf32>
    tpu.vector_store %arg7[%c0_113, %c0_114], %341 {strides = array<i32>} : memref<16x128xf32, #tpu.memory_space<vmem>>, vector<16x128xf32>,
    return
  }
  func.func @transform_0(%arg0: i32) -> (i32, i32, i32) {
    %c0_i32 = arith.constant 0 : i32
    %c0_i32_0 = arith.constant 0 : i32
    %c0_i32_1 = arith.constant 0 : i32
    return %arg0, %c0_i32, %c0_i32_0 : i32, i32, i32
  }
  func.func @transform_1(%arg0: i32) -> (i32, i32) {
    %c0_i32 = arith.constant 0 : i32
    %c0_i32_0 = arith.constant 0 : i32
    %c0_i32_1 = arith.constant 0 : i32
    return %c0_i32, %c0_i32_0 : i32, i32
  }
  func.func @transform_2(%arg0: i32) -> (i32, i32) {
    %c0_i32 = arith.constant 0 : i32
    %c0_i32_0 = arith.constant 0 : i32
    %c0_i32_1 = arith.constant 0 : i32
    return %c0_i32, %c0_i32_0 : i32, i32
  }
  func.func @transform_3(%arg0: i32) -> (i32, i32) {
    %c0_i32 = arith.constant 0 : i32
    %c0_i32_0 = arith.constant 0 : i32
    %c0_i32_1 = arith.constant 0 : i32
    return %c0_i32, %c0_i32_0 : i32, i32
  }
  func.func @transform_4(%arg0: i32) -> (i32, i32) {
    %c0_i32 = arith.constant 0 : i32
    %c0_i32_0 = arith.constant 0 : i32
    %c0_i32_1 = arith.constant 0 : i32
    return %c0_i32, %c0_i32_0 : i32, i32
  }
  func.func @transform_5(%arg0: i32) -> (i32, i32, i32) {
    %c0_i32 = arith.constant 0 : i32
    %c0_i32_0 = arith.constant 0 : i32
    %c0_i32_1 = arith.constant 0 : i32
    return %arg0, %c0_i32, %c0_i32_0 : i32, i32, i32
  }
}

</mosaic_0001>

<llo_original>
// kernel: leaf_rnn_forward.1
$region0: #{leaf_rnn_forward.1}
  #allocation0 [shape = 'u32[]', space=smem, size = 0x4, offset = 0x4, fixed_abs, tag = 'smem constant byte address 0x4 - core index']
  #allocation1 [shape = 'u32[144,128]{1,0:T(1,128)}', space=vmem, size = 0x12000, scoped, tag = 'internal scratch']
  #allocation2 [shape = 'f32[16,128]{1,0:T(8,128)}', space=vmem, size = 0x2000, scoped, tag = 'scratch operand']
  #allocation3 [shape = 'bf16[8,16,384]{2,1,0:T(16,128)(2,1)}', space=vmem, size = 0x18000, scoped, tag = 'scratch operand']
  %s0 = inlined_call_operand.vmem [shape: bf16[8,16,128], index: 0, kind: input, shape index: {}]
  %s1 = inlined_call_operand.vmem [shape: bf16[128,384], index: 1, kind: input, shape index: {}]
  %s2 = inlined_call_operand.vmem [shape: bf16[128,384], index: 2, kind: input, shape index: {}]
  %s3 = inlined_call_operand.vmem [shape: f32[1,384], index: 3, kind: input, shape index: {}]
  %s4 = inlined_call_operand.vmem [shape: f32[1,128], index: 4, kind: input, shape index: {}]
  %s5 = inlined_call_operand.vmem [shape: f32[8,16,128], index: 5, kind: output, shape index: {}]
  %s6 = sld [smem:[#allocation0]]
  $region34: #{leaf_rnn_forward.1} parent=0
    _
  %s8 = ssub.s32 1, %s6
  %s9 = scalar_select 0, %s8, %s6
  // Predicated region
  $region2: #{leaf_rnn_forward.1} parent=0 // pred_check
    _
  $region3: #{leaf_rnn_forward.1} parent=0 // pred_check_branch
    %11 = sbr.rel (0) target = $region5
  $region4: #{leaf_rnn_forward.1} parent=0 // pred_region
    _
  $region5: #{leaf_rnn_forward.1} parent=0 // pred_fallthru
    _
  // Predicated region
  $region6: #{leaf_rnn_forward.1} parent=0 // pred_check
    _
  $region7: #{leaf_rnn_forward.1} parent=0 // pred_check_branch
    %13 = sbr.rel (0) target = $region9
  $region8: #{leaf_rnn_forward.1} parent=0 // pred_region
    _
  $region9: #{leaf_rnn_forward.1} parent=0 // pred_fallthru
    _
  // Predicated region
  $region10: #{leaf_rnn_forward.1} parent=0 // pred_check
    _
  $region11: #{leaf_rnn_forward.1} parent=0 // pred_check_branch
    %15 = sbr.rel (0) target = $region13
  $region12: #{leaf_rnn_forward.1} parent=0 // pred_region
    _
  $region13: #{leaf_rnn_forward.1} parent=0 // pred_fallthru
    _
  // Predicated region
  $region14: #{leaf_rnn_forward.1} parent=0 // pred_check
    _
  $region15: #{leaf_rnn_forward.1} parent=0 // pred_check_branch
    %17 = sbr.rel (0) target = $region17
  $region16: #{leaf_rnn_forward.1} parent=0 // pred_region
    _
  $region17: #{leaf_rnn_forward.1} parent=0 // pred_fallthru
    _
  // Predicated region
  $region18: #{leaf_rnn_forward.1} parent=0 // pred_check
    _
  $region19: #{leaf_rnn_forward.1} parent=0 // pred_check_branch
    %19 = sbr.rel (0) target = $region21
  $region20: #{leaf_rnn_forward.1} parent=0 // pred_region
    _
  $region21: #{leaf_rnn_forward.1} parent=0 // pred_fallthru
    _
  %p21 = scmp.eq.s32.totalorder 0, 0
  // Predicated region
  $region22: #{leaf_rnn_forward.1} parent=0 // pred_check
    %p22 = pneg %p21
  $region23: #{leaf_rnn_forward.1} parent=0 // pred_check_branch
    %24 = sbr.rel (%p22) target = $region25
  $region24: #{leaf_rnn_forward.1} parent=0 // pred_region
    %25 = vst [vmem:[#allocation2] sm:$0xff] 0.0
    %26 = vst [vmem:[#allocation2 + $0x8] sm:$0xff] 0.0
  $region25: #{leaf_rnn_forward.1} parent=0 // pred_fallthru
    _
  %v27 = vld [vmem:[%s0] sm:$0xf]
  %v28 = vld [vmem:[%s0 + $0x4] sm:$0xf]
  %v29 = vld [vmem:[%s0 + $0x8] sm:$0xf]
  %v30 = vld [vmem:[%s0 + $0xc] sm:$0xf]
  %v31 = vld [vmem:[%s0 + $0x10] sm:$0xf]
  %v32 = vld [vmem:[%s0 + $0x14] sm:$0xf]
  %v33 = vld [vmem:[%s0 + $0x18] sm:$0xf]
  %v34 = vld [vmem:[%s0 + $0x1c] sm:$0xf]
  %v35 = vld [vmem:[%s0 + $0x20] sm:$0xf]
  %v36 = vld [vmem:[%s0 + $0x24] sm:$0xf]
  %v37 = vld [vmem:[%s0 + $0x28] sm:$0xf]
  %v38 = vld [vmem:[%s0 + $0x2c] sm:$0xf]
  %v39 = vld [vmem:[%s0 + $0x30] sm:$0xf]
  %v40 = vld [vmem:[%s0 + $0x34] sm:$0xf]
  %v41 = vld [vmem:[%s0 + $0x38] sm:$0xf]
  %v42 = vld [vmem:[%s0 + $0x3c] sm:$0xf]
  %v43 = vld [vmem:[%s1] sm:$0xff]
  %v44 = vld [vmem:[%s1 + $0x8] sm:$0xf]
  %v45 = vld [vmem:[%s1 + $0xc] sm:$0xff]
  %v46 = vld [vmem:[%s1 + $0x14] sm:$0xf]
  %v47 = vld [vmem:[%s1 + $0x18] sm:$0xff]
  %v48 = vld [vmem:[%s1 + $0x20] sm:$0xf]
  %v49 = vld [vmem:[%s1 + $0x24] sm:$0xff]
  %v50 = vld [vmem:[%s1 + $0x2c] sm:$0xf]
  %v51 = vld [vmem:[%s1 + $0x30] sm:$0xff]
  %v52 = vld [vmem:[%s1 + $0x38] sm:$0xf]
  %v53 = vld [vmem:[%s1 + $0x3c] sm:$0xff]
  %v54 = vld [vmem:[%s1 + $0x44] sm:$0xf]
  %v55 = vld [vmem:[%s1 + $0x48] sm:$0xff]
  %v56 = vld [vmem:[%s1 + $0x50] sm:$0xf]
  %v57 = vld [vmem:[%s1 + $0x54] sm:$0xff]
  %v58 = vld [vmem:[%s1 + $0x5c] sm:$0xf]
  %v59 = vld [vmem:[%s1 + $0x60] sm:$0xff]
  %v60 = vld [vmem:[%s1 + $0x68] sm:$0xf]
  %v61 = vld [vmem:[%s1 + $0x6c] sm:$0xff]
  %v62 = vld [vmem:[%s1 + $0x74] sm:$0xf]
  %v63 = vld [vmem:[%s1 + $0x78] sm:$0xff]
  %v64 = vld [vmem:[%s1 + $0x80] sm:$0xf]
  %v65 = vld [vmem:[%s1 + $0x84] sm:$0xff]
  %v66 = vld [vmem:[%s1 + $0x8c] sm:$0xf]
  %v67 = vld [vmem:[%s1 + $0x90] sm:$0xff]
  %v68 = vld [vmem:[%s1 + $0x98] sm:$0xf]
  %v69 = vld [vmem:[%s1 + $0x9c] sm:$0xff]
  %v70 = vld [vmem:[%s1 + $0xa4] sm:$0xf]
  %v71 = vld [vmem:[%s1 + $0xa8] sm:$0xff]
  %v72 = vld [vmem:[%s1 + $0xb0] sm:$0xf]
  %v73 = vld [vmem:[%s1 + $0xb4] sm:$0xff]
  %v74 = vld [vmem:[%s1 + $0xbc] sm:$0xf]
  %v75 = vld [vmem:[%s3] sm:$0x7]
  %v77 = vlaneseq
  %v78 = vshrl.u32 %v77, 7
  %v79 = vsub.s32 0, %v78
  %v80 = vrot.slane %v75, %v79
  %v81 = vlaneseq
  %v82 = vshrl.u32 %v81, 7
  %v83 = vsub.s32 1, %v82
  %v84 = vrot.slane %v75, %v83
  %v85 = vlaneseq
  %v86 = vshrl.u32 %v85, 7
  %v87 = vsub.s32 2, %v86
  %v88 = vrot.slane %v75, %v87
  %v108 = vunpack.c.l.b16 %v27
  %v109 = vunpack.c.l.b16 %v28
  %v110 = vunpack.c.l.b16 %v29
  %v111 = vunpack.c.l.b16 %v30
  %v112 = vunpack.c.l.b16 %v31
  %v113 = vunpack.c.l.b16 %v32
  %v114 = vunpack.c.l.b16 %v33
  %v115 = vunpack.c.l.b16 %v34
  %v116 = vunpack.c.l.b16 %v35
  %v117 = vunpack.c.l.b16 %v36
  %v118 = vunpack.c.l.b16 %v37
  %v119 = vunpack.c.l.b16 %v38
  %v120 = vunpack.c.l.b16 %v39
  %v121 = vunpack.c.l.b16 %v40
  %v122 = vunpack.c.l.b16 %v41
  %v123 = vunpack.c.l.b16 %v42
  %v124 = vpack.c.b16 %v109, %v108
  %v125 = vpack.c.b16 %v111, %v110
  %v126 = vpack.c.b16 %v113, %v112
  %v127 = vpack.c.b16 %v115, %v114
  %v128 = vpack.c.b16 %v117, %v116
  %v129 = vpack.c.b16 %v119, %v118
  %v130 = vpack.c.b16 %v121, %v120
  %v131 = vpack.c.b16 %v123, %v122
  %v172 = vunpack.c.l.b16 %v43
  %v173 = vunpack.c.h.b16 %v43
  %v174 = vunpack.c.l.b16 %v44
  %v175 = vunpack.c.l.b16 %v45
  %v176 = vunpack.c.h.b16 %v45
  %v177 = vunpack.c.l.b16 %v46
  %v178 = vunpack.c.l.b16 %v47
  %v179 = vunpack.c.h.b16 %v47
  %v180 = vunpack.c.l.b16 %v48
  %v181 = vunpack.c.l.b16 %v49
  %v182 = vunpack.c.h.b16 %v49
  %v183 = vunpack.c.l.b16 %v50
  %v184 = vunpack.c.l.b16 %v51
  %v185 = vunpack.c.h.b16 %v51
  %v186 = vunpack.c.l.b16 %v52
  %v187 = vunpack.c.l.b16 %v53
  %v188 = vunpack.c.h.b16 %v53
  %v189 = vunpack.c.l.b16 %v54
  %v190 = vunpack.c.l.b16 %v55
  %v191 = vunpack.c.h.b16 %v55
  %v192 = vunpack.c.l.b16 %v56
  %v193 = vunpack.c.l.b16 %v57
  %v194 = vunpack.c.h.b16 %v57
  %v195 = vunpack.c.l.b16 %v58
  %v196 = vunpack.c.l.b16 %v59
  %v197 = vunpack.c.h.b16 %v59
  %v198 = vunpack.c.l.b16 %v60
  %v199 = vunpack.c.l.b16 %v61
  %v200 = vunpack.c.h.b16 %v61
  %v201 = vunpack.c.l.b16 %v62
  %v202 = vunpack.c.l.b16 %v63
  %v203 = vunpack.c.h.b16 %v63
  %v204 = vunpack.c.l.b16 %v64
  %v205 = vunpack.c.l.b16 %v65
  %v206 = vunpack.c.h.b16 %v65
  %v207 = vunpack.c.l.b16 %v66
  %v208 = vunpack.c.l.b16 %v67
  %v209 = vunpack.c.h.b16 %v67
  %v210 = vunpack.c.l.b16 %v68
  %v211 = vunpack.c.l.b16 %v69
  %v212 = vunpack.c.h.b16 %v69
  %v213 = vunpack.c.l.b16 %v70
  %v214 = vunpack.c.l.b16 %v71
  %v215 = vunpack.c.h.b16 %v71
  %v216 = vunpack.c.l.b16 %v72
  %v217 = vunpack.c.l.b16 %v73
  %v218 = vunpack.c.h.b16 %v73
  %v219 = vunpack.c.l.b16 %v74
  %v220 = vpack.c.b16 %v175, %v172
  %v221 = vpack.c.b16 %v176, %v173
  %v222 = vpack.c.b16 %v177, %v174
  %v223 = vpack.c.b16 %v181, %v178
  %v224 = vpack.c.b16 %v182, %v179
  %v225 = vpack.c.b16 %v183, %v180
  %v226 = vpack.c.b16 %v187, %v184
  %v227 = vpack.c.b16 %v188, %v185
  %v228 = vpack.c.b16 %v189, %v186
  %v229 = vpack.c.b16 %v193, %v190
  %v230 = vpack.c.b16 %v194, %v191
  %v231 = vpack.c.b16 %v195, %v192
  %v232 = vpack.c.b16 %v199, %v196
  %v233 = vpack.c.b16 %v200, %v197
  %v234 = vpack.c.b16 %v201, %v198
  %v235 = vpack.c.b16 %v205, %v202
  %v236 = vpack.c.b16 %v206, %v203
  %v237 = vpack.c.b16 %v207, %v204
  %v238 = vpack.c.b16 %v211, %v208
  %v239 = vpack.c.b16 %v212, %v209
  %v240 = vpack.c.b16 %v213, %v210
  %v241 = vpack.c.b16 %v217, %v214
  %v242 = vpack.c.b16 %v218, %v215
  %v243 = vpack.c.b16 %v219, %v216
  %268 = vmatprep.subr.bf16.mxu0 %v221
  %269 = vmatpush1.bf16.msra.mxu0 %v220
  %270 = vmatprep.subr.bf16.mxu0 %v224
  %271 = vmatpush1.bf16.msra.mxu0 %v223
  %272 = vmatprep.subr.bf16.mxu0 %v227
  %273 = vmatpush1.bf16.msra.mxu0 %v226
  %274 = vmatprep.subr.bf16.mxu0 %v230
  %275 = vmatpush1.bf16.msra.mxu0 %v229
  %276 = vmatprep.subr.bf16.mxu0 %v233
  %277 = vmatpush1.bf16.msra.mxu0 %v232
  %278 = vmatprep.subr.bf16.mxu0 %v236
  %279 = vmatpush1.bf16.msra.mxu0 %v235
  %280 = vmatprep.subr.bf16.mxu0 %v239
  %281 = vmatpush1.bf16.msra.mxu0 %v238
  %282 = vmatprep.subr.bf16.mxu0 %v242
  %283 = vmatpush1.bf16.msra.mxu0 %v241
  %284 = vmatprep.subr.bf16.mxu0 0
  %285 = vmatpush1.bf16.msra.mxu0 0
  %286 = vmatprep.subr.bf16.mxu0 0
  %287 = vmatpush1.bf16.msra.mxu0 0
  %288 = vmatprep.subr.bf16.mxu0 0
  %289 = vmatpush1.bf16.msra.mxu0 0
  %290 = vmatprep.subr.bf16.mxu0 0
  %291 = vmatpush1.bf16.msra.mxu0 0
  %292 = vmatprep.subr.bf16.mxu0 0
  %293 = vmatpush1.bf16.msra.mxu0 0
  %294 = vmatprep.subr.bf16.mxu0 0
  %295 = vmatpush1.bf16.msra.mxu0 0
  %296 = vmatprep.subr.bf16.mxu0 0
  %297 = vmatpush1.bf16.msra.mxu0 0
  %298 = vmatprep.subr.bf16.mxu0 0
  %299 = vmatpush1.bf16.msra.mxu0 0
  %300 = vmatprep.mubr.bf16.mxu0 0
  %301 = vmatmul.mubr.bf16.gmra.mrb[0].mxu0 %v124
  %v302 = vpop.f32.mrb[0].mxu0
  %v303 = vadd.f32 %v80, %v302
  %v304 = vpop.f32.mrb[0].mxu0
  %v305 = vadd.f32 %v84, %v304
  %v306 = vpop.f32.mrb[0].mxu0
  %v307 = vadd.f32 %v80, %v306
  %v308 = vpop.f32.mrb[0].mxu0
  %v309 = vadd.f32 %v84, %v308
  %310 = vmatprep.mubr.bf16.mxu0 0
  %311 = vmatmul.mubr.bf16.gmra.mrb[0].mxu0 %v125
  %v312 = vpop.f32.mrb[0].mxu0
  %v313 = vadd.f32 %v80, %v312
  %v314 = vpop.f32.mrb[0].mxu0
  %v315 = vadd.f32 %v84, %v314
  %v316 = vpop.f32.mrb[0].mxu0
  %v317 = vadd.f32 %v80, %v316
  %v318 = vpop.f32.mrb[0].mxu0
  %v319 = vadd.f32 %v84, %v318
  %320 = vmatprep.mubr.bf16.mxu0 0
  %321 = vmatmul.mubr.bf16.gmra.mrb[0].mxu0 %v126
  %v322 = vpop.f32.mrb[0].mxu0
  %v323 = vadd.f32 %v80, %v322
  %v324 = vpop.f32.mrb[0].mxu0
  %v325 = vadd.f32 %v84, %v324
  %v326 = vpop.f32.mrb[0].mxu0
  %v327 = vadd.f32 %v80, %v326
  %v328 = vpop.f32.mrb[0].mxu0
  %v329 = vadd.f32 %v84, %v328
  %330 = vmatprep.mubr.bf16.mxu0 0
  %331 = vmatmul.mubr.bf16.gmra.mrb[0].mxu0 %v127
  %v332 = vpop.f32.mrb[0].mxu0
  %v333 = vadd.f32 %v80, %v332
  %v334 = vpop.f32.mrb[0].mxu0
  %v335 = vadd.f32 %v84, %v334
  %v336 = vpop.f32.mrb[0].mxu0
  %v337 = vadd.f32 %v80, %v336
  %v338 = vpop.f32.mrb[0].mxu0
  %v339 = vadd.f32 %v84, %v338
  %340 = vmatprep.mubr.bf16.mxu0 0
  %341 = vmatmul.mubr.bf16.gmra.mrb[0].mxu0 %v128
  %v342 = vpop.f32.mrb[0].mxu0
  %v343 = vadd.f32 %v80, %v342
  %v344 = vpop.f32.mrb[0].mxu0
  %v345 = vadd.f32 %v84, %v344
  %v346 = vpop.f32.mrb[0].mxu0
  %v347 = vadd.f32 %v80, %v346
  %v348 = vpop.f32.mrb[0].mxu0
  %v349 = vadd.f32 %v84, %v348
  %350 = vmatprep.mubr.bf16.mxu0 0
  %351 = vmatmul.mubr.bf16.gmra.mrb[0].mxu0 %v129
  %v352 = vpop.f32.mrb[0].mxu0
  %v353 = vadd.f32 %v80, %v352
  %v354 = vpop.f32.mrb[0].mxu0
  %v355 = vadd.f32 %v84, %v354
  %v356 = vpop.f32.mrb[0].mxu0
  %v357 = vadd.f32 %v80, %v356
  %v358 = vpop.f32.mrb[0].mxu0
  %v359 = vadd.f32 %v84, %v358
  %360 = vmatprep.mubr.bf16.mxu0 0
  %361 = vmatmul.mubr.bf16.gmra.mrb[0].mxu0 %v130
  %v362 = vpop.f32.mrb[0].mxu0
  %v363 = vadd.f32 %v80, %v362
  %v364 = vpop.f32.mrb[0].mxu0
  %v365 = vadd.f32 %v84, %v364
  %v366 = vpop.f32.mrb[0].mxu0
  %v367 = vadd.f32 %v80, %v366
  %v368 = vpop.f32.mrb[0].mxu0
  %v369 = vadd.f32 %v84, %v368
  %370 = vmatprep.mubr.bf16.mxu0 0
  %371 = vmatmul.mubr.bf16.gmra.mrb[0].mxu0 %v131
  %v372 = vpop.f32.mrb[0].mxu0
  %v373 = vadd.f32 %v80, %v372
  %v374 = vpop.f32.mrb[0].mxu0
  %v375 = vadd.f32 %v84, %v374
  %v376 = vpop.f32.mrb[0].mxu0
  %v377 = vadd.f32 %v80, %v376
  %v378 = vpop.f32.mrb[0].mxu0
  %v379 = vadd.f32 %v84, %v378
  %380 = vdwg.mxu0
  %381 = vmatprep.subr.bf16.mxu0 0
  %382 = vmatpush1.bf16.msra.mxu0 %v222
  %383 = vmatprep.subr.bf16.mxu0 0
  %384 = vmatpush1.bf16.msra.mxu0 %v225
  %385 = vmatprep.subr.bf16.mxu0 0
  %386 = vmatpush1.bf16.msra.mxu0 %v228
  %387 = vmatprep.subr.bf16.mxu0 0
  %388 = vmatpush1.bf16.msra.mxu0 %v231
  %389 = vmatprep.subr.bf16.mxu0 0
  %390 = vmatpush1.bf16.msra.mxu0 %v234
  %391 = vmatprep.subr.bf16.mxu0 0
  %392 = vmatpush1.bf16.msra.mxu0 %v237
  %393 = vmatprep.subr.bf16.mxu0 0
  %394 = vmatpush1.bf16.msra.mxu0 %v240
  %395 = vmatprep.subr.bf16.mxu0 0
  %396 = vmatpush1.bf16.msra.mxu0 %v243
  %397 = vmatprep.subr.bf16.mxu0 0
  %398 = vmatpush1.bf16.msra.mxu0 0
  %399 = vmatprep.subr.bf16.mxu0 0
  %400 = vmatpush1.bf16.msra.mxu0 0
  %401 = vmatprep.subr.bf16.mxu0 0
  %402 = vmatpush1.bf16.msra.mxu0 0
  %403 = vmatprep.subr.bf16.mxu0 0
  %404 = vmatpush1.bf16.msra.mxu0 0
  %405 = vmatprep.subr.bf16.mxu0 0
  %406 = vmatpush1.bf16.msra.mxu0 0
  %407 = vmatprep.subr.bf16.mxu0 0
  %408 = vmatpush1.bf16.msra.mxu0 0
  %409 = vmatprep.subr.bf16.mxu0 0
  %410 = vmatpush1.bf16.msra.mxu0 0
  %411 = vmatprep.subr.bf16.mxu0 0
  %412 = vmatpush1.bf16.msra.mxu0 0
  %413 = vmatprep.mubr.bf16.mxu0 0
  %414 = vmatmul.mubr.bf16.gmra.mrb[0].mxu0 %v124
  %v415 = vpop.f32.mrb[0].mxu0
  %v416 = vadd.f32 %v88, %v415
  %v417 = vpop.f32.mrb[0].mxu0
  %v418 = vpop.f32.mrb[0].mxu0
  %v419 = vadd.f32 %v88, %v418
  %v420 = vpop.f32.mrb[0].mxu0
  %421 = vmatprep.mubr.bf16.mxu0 0
  %422 = vmatmul.mubr.bf16.gmra.mrb[0].mxu0 %v125
  %v423 = vpop.f32.mrb[0].mxu0
  %v424 = vadd.f32 %v88, %v423
  %v425 = vpop.f32.mrb[0].mxu0
  %v426 = vpop.f32.mrb[0].mxu0
  %v427 = vadd.f32 %v88, %v426
  %v428 = vpop.f32.mrb[0].mxu0
  %429 = vmatprep.mubr.bf16.mxu0 0
  %430 = vmatmul.mubr.bf16.gmra.mrb[0].mxu0 %v126
  %v431 = vpop.f32.mrb[0].mxu0
  %v432 = vadd.f32 %v88, %v431
  %v433 = vpop.f32.mrb[0].mxu0
  %v434 = vpop.f32.mrb[0].mxu0
  %v435 = vadd.f32 %v88, %v434
  %v436 = vpop.f32.mrb[0].mxu0
  %437 = vmatprep.mubr.bf16.mxu0 0
  %438 = vmatmul.mubr.bf16.gmra.mrb[0].mxu0 %v127
  %v439 = vpop.f32.mrb[0].mxu0
  %v440 = vadd.f32 %v88, %v439
  %v441 = vpop.f32.mrb[0].mxu0
  %v442 = vpop.f32.mrb[0].mxu0
  %v443 = vadd.f32 %v88, %v442
  %v444 = vpop.f32.mrb[0].mxu0
  %445 = vmatprep.mubr.bf16.mxu0 0
  %446 = vmatmul.mubr.bf16.gmra.mrb[0].mxu0 %v128
  %v447 = vpop.f32.mrb[0].mxu0
  %v448 = vadd.f32 %v88, %v447
  %v449 = vpop.f32.mrb[0].mxu0
  %v450 = vpop.f32.mrb[0].mxu0
  %v451 = vadd.f32 %v88, %v450
  %v452 = vpop.f32.mrb[0].mxu0
  %453 = vmatprep.mubr.bf16.mxu0 0
  %454 = vmatmul.mubr.bf16.gmra.mrb[0].mxu0 %v129
  %v455 = vpop.f32.mrb[0].mxu0
  %v456 = vadd.f32 %v88, %v455
  %v457 = vpop.f32.mrb[0].mxu0
  %v458 = vpop.f32.mrb[0].mxu0
  %v459 = vadd.f32 %v88, %v458
  %v460 = vpop.f32.mrb[0].mxu0
  %461 = vmatprep.mubr.bf16.mxu0 0
  %462 = vmatmul.mubr.bf16.gmra.mrb[0].mxu0 %v130
  %v463 = vpop.f32.mrb[0].mxu0
  %v464 = vadd.f32 %v88, %v463
  %v465 = vpop.f32.mrb[0].mxu0
  %v466 = vpop.f32.mrb[0].mxu0
  %v467 = vadd.f32 %v88, %v466
  %v468 = vpop.f32.mrb[0].mxu0
  %469 = vmatprep.mubr.bf16.mxu0 0
  %470 = vmatmul.mubr.bf16.gmra.mrb[0].mxu0 %v131
  %v471 = vpop.f32.mrb[0].mxu0
  %v472 = vadd.f32 %v88, %v471
  %v473 = vpop.f32.mrb[0].mxu0
  %v474 = vpop.f32.mrb[0].mxu0
  %v475 = vadd.f32 %v88, %v474
  %v476 = vpop.f32.mrb[0].mxu0
  %477 = vdwg.mxu0
  %v478 = vpack.c.bf16 %v307, %v303
  %v479 = vpack.c.bf16 %v309, %v305
  %v480 = vpack.c.bf16 %v419, %v416
  %v481 = vpack.c.bf16 %v317, %v313
  %v482 = vpack.c.bf16 %v319, %v315
  %v483 = vpack.c.bf16 %v427, %v424
  %v484 = vpack.c.bf16 %v327, %v323
  %v485 = vpack.c.bf16 %v329, %v325
  %v486 = vpack.c.bf16 %v435, %v432
  %v487 = vpack.c.bf16 %v337, %v333
  %v488 = vpack.c.bf16 %v339, %v335
  %v489 = vpack.c.bf16 %v443, %v440
  %v490 = vpack.c.bf16 %v347, %v343
  %v491 = vpack.c.bf16 %v349, %v345
  %v492 = vpack.c.bf16 %v451, %v448
  %v493 = vpack.c.bf16 %v357, %v353
  %v494 = vpack.c.bf16 %v359, %v355
  %v495 = vpack.c.bf16 %v459, %v456
  %v496 = vpack.c.bf16 %v367, %v363
  %v497 = vpack.c.bf16 %v369, %v365
  %v498 = vpack.c.bf16 %v467, %v464
  %v499 = vpack.c.bf16 %v377, %v373
  %v500 = vpack.c.bf16 %v379, %v375
  %v501 = vpack.c.bf16 %v475, %v472
  %502 = vst [vmem:[#allocation3] sm:$0xff] %v478
  %503 = vst [vmem:[#allocation3 + $0x8] sm:$0xff] %v479
  %504 = vst [vmem:[#allocation3 + $0x10] sm:$0xff] %v480
  %505 = vst [vmem:[#allocation3 + $0x18] sm:$0xff] %v481
  %506 = vst [vmem:[#allocation3 + $0x20] sm:$0xff] %v482
  %507 = vst [vmem:[#allocation3 + $0x28] sm:$0xff] %v483
  %508 = vst [vmem:[#allocation3 + $0x30] sm:$0xff] %v484
  %509 = vst [vmem:[#allocation3 + $0x38] sm:$0xff] %v485
  %510 = vst [vmem:[#allocation3 + $0x40] sm:$0xff] %v486
  %511 = vst [vmem:[#allocation3 + $0x48] sm:$0xff] %v487
  %512 = vst [vmem:[#allocation3 + $0x50] sm:$0xff] %v488
  %513 = vst [vmem:[#allocation3 + $0x58] sm:$0xff] %v489
  %514 = vst [vmem:[#allocation3 + $0x60] sm:$0xff] %v490
  %515 = vst [vmem:[#allocation3 + $0x68] sm:$0xff] %v491
  %516 = vst [vmem:[#allocation3 + $0x70] sm:$0xff] %v492
  %517 = vst [vmem:[#allocation3 + $0x78] sm:$0xff] %v493
  %518 = vst [vmem:[#allocation3 + $0x80] sm:$0xff] %v494
  %519 = vst [vmem:[#allocation3 + $0x88] sm:$0xff] %v495
  %520 = vst [vmem:[#allocation3 + $0x90] sm:$0xff] %v496
  %521 = vst [vmem:[#allocation3 + $0x98] sm:$0xff] %v497
  %522 = vst [vmem:[#allocation3 + $0xa0] sm:$0xff] %v498
  %523 = vst [vmem:[#allocation3 + $0xa8] sm:$0xff] %v499
  %524 = vst [vmem:[#allocation3 + $0xb0] sm:$0xff] %v500
  %525 = vst [vmem:[#allocation3 + $0xb8] sm:$0xff] %v501
  %v526 = vld [vmem:[%s2] sm:$0xff]
  %v527 = vld [vmem:[%s2 + $0x8] sm:$0xf]
  %v528 = vld [vmem:[%s2 + $0xc] sm:$0xff]
  %v529 = vld [vmem:[%s2 + $0x14] sm:$0xf]
  %v530 = vld [vmem:[%s2 + $0x18] sm:$0xff]
  %v531 = vld [vmem:[%s2 + $0x20] sm:$0xf]
  %v532 = vld [vmem:[%s2 + $0x24] sm:$0xff]
  %v533 = vld [vmem:[%s2 + $0x2c] sm:$0xf]
  %v534 = vld [vmem:[%s2 + $0x30] sm:$0xff]
  %v535 = vld [vmem:[%s2 + $0x38] sm:$0xf]
  %v536 = vld [vmem:[%s2 + $0x3c] sm:$0xff]
  %v537 = vld [vmem:[%s2 + $0x44] sm:$0xf]
  %v538 = vld [vmem:[%s2 + $0x48] sm:$0xff]
  %v539 = vld [vmem:[%s2 + $0x50] sm:$0xf]
  %v540 = vld [vmem:[%s2 + $0x54] sm:$0xff]
  %v541 = vld [vmem:[%s2 + $0x5c] sm:$0xf]
  %v542 = vld [vmem:[%s2 + $0x60] sm:$0xff]
  %v543 = vld [vmem:[%s2 + $0x68] sm:$0xf]
  %v544 = vld [vmem:[%s2 + $0x6c] sm:$0xff]
  %v545 = vld [vmem:[%s2 + $0x74] sm:$0xf]
  %v546 = vld [vmem:[%s2 + $0x78] sm:$0xff]
  %v547 = vld [vmem:[%s2 + $0x80] sm:$0xf]
  %v548 = vld [vmem:[%s2 + $0x84] sm:$0xff]
  %v549 = vld [vmem:[%s2 + $0x8c] sm:$0xf]
  %v550 = vld [vmem:[%s2 + $0x90] sm:$0xff]
  %v551 = vld [vmem:[%s2 + $0x98] sm:$0xf]
  %v552 = vld [vmem:[%s2 + $0x9c] sm:$0xff]
  %v553 = vld [vmem:[%s2 + $0xa4] sm:$0xf]
  %v554 = vld [vmem:[%s2 + $0xa8] sm:$0xff]
  %v555 = vld [vmem:[%s2 + $0xb0] sm:$0xf]
  %v556 = vld [vmem:[%s2 + $0xb4] sm:$0xff]
  %v557 = vld [vmem:[%s2 + $0xbc] sm:$0xf]
  %v558 = vld [vmem:[%s4] sm:$0x1]
  %v560 = vlaneseq
  %v561 = vshrl.u32 %v560, 7
  %v562 = vsub.s32 0, %v561
  %v563 = vrot.slane %v558, %v562
  %v565 = vld [vmem:[#allocation2] sm:$0xff]
  %v566 = vld [vmem:[#allocation2 + $0x8] sm:$0xff]
  %v567 = vld [vmem:[#allocation3] sm:$0xff]
  %v568 = vld [vmem:[#allocation3 + $0x8] sm:$0xff]
  %v569 = vld [vmem:[#allocation3 + $0x10] sm:$0xff]
  %v570 = vunpack.c.l.bf16 %v567
  %v571 = vunpack.c.l.bf16 %v568
  %v572 = vunpack.c.l.bf16 %v569
  %v573 = vunpack.c.h.bf16 %v567
  %v574 = vunpack.c.h.bf16 %v568
  %v575 = vunpack.c.h.bf16 %v569
  %v576 = vpack.c.bf16 %v566, %v565
  %v609 = vunpack.c.l.b16 %v526
  %v610 = vunpack.c.h.b16 %v526
  %v611 = vunpack.c.l.b16 %v527
  %v612 = vunpack.c.l.b16 %v528
  %v613 = vunpack.c.h.b16 %v528
  %v614 = vunpack.c.l.b16 %v529
  %v615 = vunpack.c.l.b16 %v530
  %v616 = vunpack.c.h.b16 %v530
  %v617 = vunpack.c.l.b16 %v531
  %v618 = vunpack.c.l.b16 %v532
  %v619 = vunpack.c.h.b16 %v532
  %v620 = vunpack.c.l.b16 %v533
  %v621 = vunpack.c.l.b16 %v534
  %v622 = vunpack.c.h.b16 %v534
  %v623 = vunpack.c.l.b16 %v535
  %v624 = vunpack.c.l.b16 %v536
  %v625 = vunpack.c.h.b16 %v536
  %v626 = vunpack.c.l.b16 %v537
  %v627 = vunpack.c.l.b16 %v538
  %v628 = vunpack.c.h.b16 %v538
  %v629 = vunpack.c.l.b16 %v539
  %v630 = vunpack.c.l.b16 %v540
  %v631 = vunpack.c.h.b16 %v540
  %v632 = vunpack.c.l.b16 %v541
  %v633 = vunpack.c.l.b16 %v542
  %v634 = vunpack.c.h.b16 %v542
  %v635 = vunpack.c.l.b16 %v543
  %v636 = vunpack.c.l.b16 %v544
  %v637 = vunpack.c.h.b16 %v544
  %v638 = vunpack.c.l.b16 %v545
  %v639 = vunpack.c.l.b16 %v546
  %v640 = vunpack.c.h.b16 %v546
  %v641 = vunpack.c.l.b16 %v547
  %v642 = vunpack.c.l.b16 %v548
  %v643 = vunpack.c.h.b16 %v548
  %v644 = vunpack.c.l.b16 %v549
  %v645 = vunpack.c.l.b16 %v550
  %v646 = vunpack.c.h.b16 %v550
  %v647 = vunpack.c.l.b16 %v551
  %v648 = vunpack.c.l.b16 %v552
  %v649 = vunpack.c.h.b16 %v552
  %v650 = vunpack.c.l.b16 %v553
  %v651 = vunpack.c.l.b16 %v554
  %v652 = vunpack.c.h.b16 %v554
  %v653 = vunpack.c.l.b16 %v555
  %v654 = vunpack.c.l.b16 %v556
  %v655 = vunpack.c.h.b16 %v556
  %v656 = vunpack.c.l.b16 %v557
  %v657 = vpack.c.b16 %v612, %v609
  %v658 = vpack.c.b16 %v613, %v610
  %v659 = vpack.c.b16 %v614, %v611
  %v660 = vpack.c.b16 %v618, %v615
  %v661 = vpack.c.b16 %v619, %v616
  %v662 = vpack.c.b16 %v620, %v617
  %v663 = vpack.c.b16 %v624, %v621
  %v664 = vpack.c.b16 %v625, %v622
  %v665 = vpack.c.b16 %v626, %v623
  %v666 = vpack.c.b16 %v630, %v627
  %v667 = vpack.c.b16 %v631, %v628
  %v668 = vpack.c.b16 %v632, %v629
  %v669 = vpack.c.b16 %v636, %v633
  %v670 = vpack.c.b16 %v637, %v634
  %v671 = vpack.c.b16 %v638, %v635
  %v672 = vpack.c.b16 %v642, %v639
  %v673 = vpack.c.b16 %v643, %v640
  %v674 = vpack.c.b16 %v644, %v641
  %v675 = vpack.c.b16 %v648, %v645
  %v676 = vpack.c.b16 %v649, %v646
  %v677 = vpack.c.b16 %v650, %v647
  %v678 = vpack.c.b16 %v654, %v651
  %v679 = vpack.c.b16 %v655, %v652
  %v680 = vpack.c.b16 %v656, %v653
  %705 = vmatprep.subr.bf16.mxu0 %v658
  %706 = vmatpush1.bf16.msra.mxu0 %v657
  %707 = vmatprep.subr.bf16.mxu0 %v661
  %708 = vmatpush1.bf16.msra.mxu0 %v660
  %709 = vmatprep.subr.bf16.mxu0 %v664
  %710 = vmatpush1.bf16.msra.mxu0 %v663
  %711 = vmatprep.subr.bf16.mxu0 %v667
  %712 = vmatpush1.bf16.msra.mxu0 %v666
  %713 = vmatprep.subr.bf16.mxu0 %v670
  %714 = vmatpush1.bf16.msra.mxu0 %v669
  %715 = vmatprep.subr.bf16.mxu0 %v673
  %716 = vmatpush1.bf16.msra.mxu0 %v672
  %717 = vmatprep.subr.bf16.mxu0 %v676
  %718 = vmatpush1.bf16.msra.mxu0 %v675
  %719 = vmatprep.subr.bf16.mxu0 %v679
  %720 = vmatpush1.bf16.msra.mxu0 %v678
  %721 = vmatprep.subr.bf16.mxu0 0
  %722 = vmatpush1.bf16.msra.mxu0 0
  %723 = vmatprep.subr.bf16.mxu0 0
  %724 = vmatpush1.bf16.msra.mxu0 0
  %725 = vmatprep.subr.bf16.mxu0 0
  %726 = vmatpush1.bf16.msra.mxu0 0
  %727 = vmatprep.subr.bf16.mxu0 0
  %728 = vmatpush1.bf16.msra.mxu0 0
  %729 = vmatprep.subr.bf16.mxu0 0
  %730 = vmatpush1.bf16.msra.mxu0 0
  %731 = vmatprep.subr.bf16.mxu0 0
  %732 = vmatpush1.bf16.msra.mxu0 0
  %733 = vmatprep.subr.bf16.mxu0 0
  %734 = vmatpush1.bf16.msra.mxu0 0
  %735 = vmatprep.subr.bf16.mxu0 0
  %736 = vmatpush1.bf16.msra.mxu0 0
  %737 = vmatprep.mubr.bf16.mxu0 0
  %738 = vmatmul.mubr.bf16.gmra.mrb[0].mxu0 %v576
  %v739 = vpop.f32.mrb[0].mxu0
  %v740 = vadd.f32 0.0, %v739
  %v741 = vpop.f32.mrb[0].mxu0
  %v742 = vadd.f32 0.0, %v741
  %v743 = vpop.f32.mrb[0].mxu0
  %v744 = vadd.f32 0.0, %v743
  %v745 = vpop.f32.mrb[0].mxu0
  %v746 = vadd.f32 0.0, %v745
  %747 = vdwg.mxu0
  %748 = vmatprep.subr.bf16.mxu0 0
  %749 = vmatpush1.bf16.msra.mxu0 %v659
  %750 = vmatprep.subr.bf16.mxu0 0
  %751 = vmatpush1.bf16.msra.mxu0 %v662
  %752 = vmatprep.subr.bf16.mxu0 0
  %753 = vmatpush1.bf16.msra.mxu0 %v665
  %754 = vmatprep.subr.bf16.mxu0 0
  %755 = vmatpush1.bf16.msra.mxu0 %v668
  %756 = vmatprep.subr.bf16.mxu0 0
  %757 = vmatpush1.bf16.msra.mxu0 %v671
  %758 = vmatprep.subr.bf16.mxu0 0
  %759 = vmatpush1.bf16.msra.mxu0 %v674
  %760 = vmatprep.subr.bf16.mxu0 0
  %761 = vmatpush1.bf16.msra.mxu0 %v677
  %762 = vmatprep.subr.bf16.mxu0 0
  %763 = vmatpush1.bf16.msra.mxu0 %v680
  %764 = vmatprep.subr.bf16.mxu0 0
  %765 = vmatpush1.bf16.msra.mxu0 0
  %766 = vmatprep.subr.bf16.mxu0 0
  %767 = vmatpush1.bf16.msra.mxu0 0
  %768 = vmatprep.subr.bf16.mxu0 0
  %769 = vmatpush1.bf16.msra.mxu0 0
  %770 = vmatprep.subr.bf16.mxu0 0
  %771 = vmatpush1.bf16.msra.mxu0 0
  %772 = vmatprep.subr.bf16.mxu0 0
  %773 = vmatpush1.bf16.msra.mxu0 0
  %774 = vmatprep.subr.bf16.mxu0 0
  %775 = vmatpush1.bf16.msra.mxu0 0
  %776 = vmatprep.subr.bf16.mxu0 0
  %777 = vmatpush1.bf16.msra.mxu0 0
  %778 = vmatprep.subr.bf16.mxu0 0
  %779 = vmatpush1.bf16.msra.mxu0 0
  %780 = vmatprep.mubr.bf16.mxu0 0
  %781 = vmatmul.mubr.bf16.gmra.mrb[0].mxu0 %v576
  %v782 = vpop.f32.mrb[0].mxu0
  %v783 = vadd.f32 0.0, %v782
  %v784 = vpop.f32.mrb[0].mxu0
  %v785 = vpop.f32.mrb[0].mxu0
  %v786 = vadd.f32 0.0, %v785
  %v787 = vpop.f32.mrb[0].mxu0
  %788 = vdwg.mxu0
  %v789 = vadd.f32 %v570, %v740
  %v790 = vadd.f32 %v573, %v744
  %v791 = vmul.f32 %v789, 0.5
  %v792 = vmul.f32 %v790, 0.5
  %v793 = vtanh.pop %v791
  %v794 = vtanh.pop %v792
  %v795 = vadd.f32 %v793, 1.0
  %v796 = vadd.f32 %v794, 1.0
  %v797 = vmul.f32 %v795, 0.5
  %v798 = vmul.f32 %v796, 0.5
  %v799 = vadd.f32 %v571, %v742
  %v800 = vadd.f32 %v574, %v746
  %v801 = vmul.f32 %v799, 0.5
  %v802 = vmul.f32 %v800, 0.5
  %v803 = vtanh.pop %v801
  %v804 = vtanh.pop %v802
  %v805 = vadd.f32 %v803, 1.0
  %v806 = vadd.f32 %v804, 1.0
  %v807 = vmul.f32 %v805, 0.5
  %v808 = vmul.f32 %v806, 0.5
  %v809 = vadd.f32 %v783, %v563
  %v810 = vadd.f32 %v786, %v563
  %v811 = vmul.f32 %v797, %v809
  %v812 = vmul.f32 %v798, %v810
  %v813 = vadd.f32 %v572, %v811
  %v814 = vadd.f32 %v575, %v812
  %v815 = vtanh.pop %v813
  %v816 = vtanh.pop %v814
  %v817 = vsub.f32 1.0, %v807
  %v818 = vsub.f32 1.0, %v808
  %v819 = vmul.f32 %v817, %v815
  %v820 = vmul.f32 %v818, %v816
  %v821 = vmul.f32 %v807, %v565
  %v822 = vmul.f32 %v808, %v566
  %v823 = vadd.f32 %v819, %v821
  %v824 = vadd.f32 %v820, %v822
  %825 = vst [vmem:[%s5] sm:$0xff] %v823
  %826 = vst [vmem:[%s5 + $0x8] sm:$0xff] %v824
  %s827 = scalar_lea.vmem [#allocation3], 24
  %v828 = vld [vmem:[%s827] sm:$0xff]
  %v829 = vld [vmem:[%s827 + $0x8] sm:$0xff]
  %v830 = vld [vmem:[%s827 + $0x10] sm:$0xff]
  %v831 = vunpack.c.l.bf16 %v828
  %v832 = vunpack.c.l.bf16 %v829
  %v833 = vunpack.c.l.bf16 %v830
  %v834 = vunpack.c.h.bf16 %v828
  %v835 = vunpack.c.h.bf16 %v829
  %v836 = vunpack.c.h.bf16 %v830
  %v837 = vpack.c.bf16 %v824, %v823
  %838 = vmatprep.subr.bf16.mxu0 %v658
  %839 = vmatpush1.bf16.msra.mxu0 %v657
  %840 = vmatprep.subr.bf16.mxu0 %v661
  %841 = vmatpush1.bf16.msra.mxu0 %v660
  %842 = vmatprep.subr.bf16.mxu0 %v664
  %843 = vmatpush1.bf16.msra.mxu0 %v663
  %844 = vmatprep.subr.bf16.mxu0 %v667
  %845 = vmatpush1.bf16.msra.mxu0 %v666
  %846 = vmatprep.subr.bf16.mxu0 %v670
  %847 = vmatpush1.bf16.msra.mxu0 %v669
  %848 = vmatprep.subr.bf16.mxu0 %v673
  %849 = vmatpush1.bf16.msra.mxu0 %v672
  %850 = vmatprep.subr.bf16.mxu0 %v676
  %851 = vmatpush1.bf16.msra.mxu0 %v675
  %852 = vmatprep.subr.bf16.mxu0 %v679
  %853 = vmatpush1.bf16.msra.mxu0 %v678
  %854 = vmatprep.subr.bf16.mxu0 0
  %855 = vmatpush1.bf16.msra.mxu0 0
  %856 = vmatprep.subr.bf16.mxu0 0
  %857 = vmatpush1.bf16.msra.mxu0 0
  %858 = vmatprep.subr.bf16.mxu0 0
  %859 = vmatpush1.bf16.msra.mxu0 0
  %860 = vmatprep.subr.bf16.mxu0 0
  %861 = vmatpush1.bf16.msra.mxu0 0
  %862 = vmatprep.subr.bf16.mxu0 0
  %863 = vmatpush1.bf16.msra.mxu0 0
  %864 = vmatprep.subr.bf16.mxu0 0
  %865 = vmatpush1.bf16.msra.mxu0 0
  %866 = vmatprep.subr.bf16.mxu0 0
  %867 = vmatpush1.bf16.msra.mxu0 0
  %868 = vmatprep.subr.bf16.mxu0 0
  %869 = vmatpush1.bf16.msra.mxu0 0
  %870 = vmatprep.mubr.bf16.mxu0 0
  %871 = vmatmul.mubr.bf16.gmra.mrb[0].mxu0 %v837
  %v872 = vpop.f32.mrb[0].mxu0
  %v873 = vadd.f32 0.0, %v872
  %v874 = vpop.f32.mrb[0].mxu0
  %v875 = vadd.f32 0.0, %v874
  %v876 = vpop.f32.mrb[0].mxu0
  %v877 = vadd.f32 0.0, %v876
  %v878 = vpop.f32.mrb[0].mxu0
  %v879 = vadd.f32 0.0, %v878
  %880 = vdwg.mxu0
  %881 = vmatprep.subr.bf16.mxu0 0
  %882 = vmatpush1.bf16.msra.mxu0 %v659
  %883 = vmatprep.subr.bf16.mxu0 0
  %884 = vmatpush1.bf16.msra.mxu0 %v662
  %885 = vmatprep.subr.bf16.mxu0 0
  %886 = vmatpush1.bf16.msra.mxu0 %v665
  %887 = vmatprep.subr.bf16.mxu0 0
  %888 = vmatpush1.bf16.msra.mxu0 %v668
  %889 = vmatprep.subr.bf16.mxu0 0
  %890 = vmatpush1.bf16.msra.mxu0 %v671
  %891 = vmatprep.subr.bf16.mxu0 0
  %892 = vmatpush1.bf16.msra.mxu0 %v674
  %893 = vmatprep.subr.bf16.mxu0 0
  %894 = vmatpush1.bf16.msra.mxu0 %v677
  %895 = vmatprep.subr.bf16.mxu0 0
  %896 = vmatpush1.bf16.msra.mxu0 %v680
  %897 = vmatprep.subr.bf16.mxu0 0
  %898 = vmatpush1.bf16.msra.mxu0 0
  %899 = vmatprep.subr.bf16.mxu0 0
  %900 = vmatpush1.bf16.msra.mxu0 0
  %901 = vmatprep.subr.bf16.mxu0 0
  %902 = vmatpush1.bf16.msra.mxu0 0
  %903 = vmatprep.subr.bf16.mxu0 0
  %904 = vmatpush1.bf16.msra.mxu0 0
  %905 = vmatprep.subr.bf16.mxu0 0
  %906 = vmatpush1.bf16.msra.mxu0 0
  %907 = vmatprep.subr.bf16.mxu0 0
  %908 = vmatpush1.bf16.msra.mxu0 0
  %909 = vmatprep.subr.bf16.mxu0 0
  %910 = vmatpush1.bf16.msra.mxu0 0
  %911 = vmatprep.subr.bf16.mxu0 0
  %912 = vmatpush1.bf16.msra.mxu0 0
  %913 = vmatprep.mubr.bf16.mxu0 0
  %914 = vmatmul.mubr.bf16.gmra.mrb[0].mxu0 %v837
  %v915 = vpop.f32.mrb[0].mxu0
  %v916 = vadd.f32 0.0, %v915
  %v917 = vpop.f32.mrb[0].mxu0
  %v918 = vpop.f32.mrb[0].mxu0
  %v919 = vadd.f32 0.0, %v918
  %v920 = vpop.f32.mrb[0].mxu0
  %921 = vdwg.mxu0
  %v922 = vadd.f32 %v831, %v873
  %v923 = vadd.f32 %v834, %v877
  %v924 = vmul.f32 %v922, 0.5
  %v925 = vmul.f32 %v923, 0.5
  %v926 = vtanh.pop %v924
  %v927 = vtanh.pop %v925
  %v928 = vadd.f32 %v926, 1.0
  %v929 = vadd.f32 %v927, 1.0
  %v930 = vmul.f32 %v928, 0.5
  %v931 = vmul.f32 %v929, 0.5
  %v932 = vadd.f32 %v832, %v875
  %v933 = vadd.f32 %v835, %v879
  %v934 = vmul.f32 %v932, 0.5
  %v935 = vmul.f32 %v933, 0.5
  %v936 = vtanh.pop %v934
  %v937 = vtanh.pop %v935
  %v938 = vadd.f32 %v936, 1.0
  %v939 = vadd.f32 %v937, 1.0
  %v940 = vmul.f32 %v938, 0.5
  %v941 = vmul.f32 %v939, 0.5
  %v942 = vadd.f32 %v916, %v563
  %v943 = vadd.f32 %v919, %v563
  %v944 = vmul.f32 %v930, %v942
  %v945 = vmul.f32 %v931, %v943
  %v946 = vadd.f32 %v833, %v944
  %v947 = vadd.f32 %v836, %v945
  %v948 = vtanh.pop %v946
  %v949 = vtanh.pop %v947
  %v950 = vsub.f32 1.0, %v940
  %v951 = vsub.f32 1.0, %v941
  %v952 = vmul.f32 %v950, %v948
  %v953 = vmul.f32 %v951, %v949
  %v954 = vmul.f32 %v940, %v823
  %v955 = vmul.f32 %v941, %v824
  %v956 = vadd.f32 %v952, %v954
  %v957 = vadd.f32 %v953, %v955
  %s958 = scalar_lea.vmem %s5, 16
  %959 = vst [vmem:[%s958] sm:$0xff] %v956
  %960 = vst [vmem:[%s958 + $0x8] sm:$0xff] %v957
  %s961 = scalar_lea.vmem [#allocation3], 48
  %v962 = vld [vmem:[%s961] sm:$0xff]
  %v963 = vld [vmem:[%s961 + $0x8] sm:$0xff]
  %v964 = vld [vmem:[%s961 + $0x10] sm:$0xff]
  %v965 = vunpack.c.l.bf16 %v962
  %v966 = vunpack.c.l.bf16 %v963
  %v967 = vunpack.c.l.bf16 %v964
  %v968 = vunpack.c.h.bf16 %v962
  %v969 = vunpack.c.h.bf16 %v963
  %v970 = vunpack.c.h.bf16 %v964
  %v971 = vpack.c.bf16 %v957, %v956
  %972 = vmatprep.subr.bf16.mxu0 %v658
  %973 = vmatpush1.bf16.msra.mxu0 %v657
  %974 = vmatprep.subr.bf16.mxu0 %v661
  %975 = vmatpush1.bf16.msra.mxu0 %v660
  %976 = vmatprep.subr.bf16.mxu0 %v664
  %977 = vmatpush1.bf16.msra.mxu0 %v663
  %978 = vmatprep.subr.bf16.mxu0 %v667
  %979 = vmatpush1.bf16.msra.mxu0 %v666
  %980 = vmatprep.subr.bf16.mxu0 %v670
  %981 = vmatpush1.bf16.msra.mxu0 %v669
  %982 = vmatprep.subr.bf16.mxu0 %v673
  %983 = vmatpush1.bf16.msra.mxu0 %v672
  %984 = vmatprep.subr.bf16.mxu0 %v676
  %985 = vmatpush1.bf16.msra.mxu0 %v675
  %986 = vmatprep.subr.bf16.mxu0 %v679
  %987 = vmatpush1.bf16.msra.mxu0 %v678
  %988 = vmatprep.subr.bf16.mxu0 0
  %989 = vmatpush1.bf16.msra.mxu0 0
  %990 = vmatprep.subr.bf16.mxu0 0
  %991 = vmatpush1.bf16.msra.mxu0 0
  %992 = vmatprep.subr.bf16.mxu0 0
  %993 = vmatpush1.bf16.msra.mxu0 0
  %994 = vmatprep.subr.bf16.mxu0 0
  %995 = vmatpush1.bf16.msra.mxu0 0
  %996 = vmatprep.subr.bf16.mxu0 0
  %997 = vmatpush1.bf16.msra.mxu0 0
  %998 = vmatprep.subr.bf16.mxu0 0
  %999 = vmatpush1.bf16.msra.mxu0 0
  %1000 = vmatprep.subr.bf16.mxu0 0
  %1001 = vmatpush1.bf16.msra.mxu0 0
  %1002 = vmatprep.subr.bf16.mxu0 0
  %1003 = vmatpush1.bf16.msra.mxu0 0
  %1004 = vmatprep.mubr.bf16.mxu0 0
  %1005 = vmatmul.mubr.bf16.gmra.mrb[0].mxu0 %v971
  %v1006 = vpop.f32.mrb[0].mxu0
  %v1007 = vadd.f32 0.0, %v1006
  %v1008 = vpop.f32.mrb[0].mxu0
  %v1009 = vadd.f32 0.0, %v1008
  %v1010 = vpop.f32.mrb[0].mxu0
  %v1011 = vadd.f32 0.0, %v1010
  %v1012 = vpop.f32.mrb[0].mxu0
  %v1013 = vadd.f32 0.0, %v1012
  %1014 = vdwg.mxu0
  %1015 = vmatprep.subr.bf16.mxu0 0
  %1016 = vmatpush1.bf16.msra.mxu0 %v659
  %1017 = vmatprep.subr.bf16.mxu0 0
  %1018 = vmatpush1.bf16.msra.mxu0 %v662
  %1019 = vmatprep.subr.bf16.mxu0 0
  %1020 = vmatpush1.bf16.msra.mxu0 %v665
  %1021 = vmatprep.subr.bf16.mxu0 0
  %1022 = vmatpush1.bf16.msra.mxu0 %v668
  %1023 = vmatprep.subr.bf16.mxu0 0
  %1024 = vmatpush1.bf16.msra.mxu0 %v671
  %1025 = vmatprep.subr.bf16.mxu0 0
  %1026 = vmatpush1.bf16.msra.mxu0 %v674
  %1027 = vmatprep.subr.bf16.mxu0 0
  %1028 = vmatpush1.bf16.msra.mxu0 %v677
  %1029 = vmatprep.subr.bf16.mxu0 0
  %1030 = vmatpush1.bf16.msra.mxu0 %v680
  %1031 = vmatprep.subr.bf16.mxu0 0
  %1032 = vmatpush1.bf16.msra.mxu0 0
  %1033 = vmatprep.subr.bf16.mxu0 0
  %1034 = vmatpush1.bf16.msra.mxu0 0
  %1035 = vmatprep.subr.bf16.mxu0 0
  %1036 = vmatpush1.bf16.msra.mxu0 0
  %1037 = vmatprep.subr.bf16.mxu0 0
  %1038 = vmatpush1.bf16.msra.mxu0 0
  %1039 = vmatprep.subr.bf16.mxu0 0
  %1040 = vmatpush1.bf16.msra.mxu0 0
  %1041 = vmatprep.subr.bf16.mxu0 0
  %1042 = vmatpush1.bf16.msra.mxu0 0
  %1043 = vmatprep.subr.bf16.mxu0 0
  %1044 = vmatpush1.bf16.msra.mxu0 0
  %1045 = vmatprep.subr.bf16.mxu0 0
  %1046 = vmatpush1.bf16.msra.mxu0 0
  %1047 = vmatprep.mubr.bf16.mxu0 0
  %1048 = vmatmul.mubr.bf16.gmra.mrb[0].mxu0 %v971
  %v1049 = vpop.f32.mrb[0].mxu0
  %v1050 = vadd.f32 0.0, %v1049
  %v1051 = vpop.f32.mrb[0].mxu0
  %v1052 = vpop.f32.mrb[0].mxu0
  %v1053 = vadd.f32 0.0, %v1052
  %v1054 = vpop.f32.mrb[0].mxu0
  %1055 = vdwg.mxu0
  %v1056 = vadd.f32 %v965, %v1007
  %v1057 = vadd.f32 %v968, %v1011
  %v1058 = vmul.f32 %v1056, 0.5
  %v1059 = vmul.f32 %v1057, 0.5
  %v1060 = vtanh.pop %v1058
  %v1061 = vtanh.pop %v1059
  %v1062 = vadd.f32 %v1060, 1.0
  %v1063 = vadd.f32 %v1061, 1.0
  %v1064 = vmul.f32 %v1062, 0.5
  %v1065 = vmul.f32 %v1063, 0.5
  %v1066 = vadd.f32 %v966, %v1009
  %v1067 = vadd.f32 %v969, %v1013
  %v1068 = vmul.f32 %v1066, 0.5
  %v1069 = vmul.f32 %v1067, 0.5
  %v1070 = vtanh.pop %v1068
  %v1071 = vtanh.pop %v1069
  %v1072 = vadd.f32 %v1070, 1.0
  %v1073 = vadd.f32 %v1071, 1.0
  %v1074 = vmul.f32 %v1072, 0.5
  %v1075 = vmul.f32 %v1073, 0.5
  %v1076 = vadd.f32 %v1050, %v563
  %v1077 = vadd.f32 %v1053, %v563
  %v1078 = vmul.f32 %v1064, %v1076
  %v1079 = vmul.f32 %v1065, %v1077
  %v1080 = vadd.f32 %v967, %v1078
  %v1081 = vadd.f32 %v970, %v1079
  %v1082 = vtanh.pop %v1080
  %v1083 = vtanh.pop %v1081
  %v1084 = vsub.f32 1.0, %v1074
  %v1085 = vsub.f32 1.0, %v1075
  %v1086 = vmul.f32 %v1084, %v1082
  %v1087 = vmul.f32 %v1085, %v1083
  %v1088 = vmul.f32 %v1074, %v956
  %v1089 = vmul.f32 %v1075, %v957
  %v1090 = vadd.f32 %v1086, %v1088
  %v1091 = vadd.f32 %v1087, %v1089
  %s1092 = scalar_lea.vmem %s5, 32
  %1093 = vst [vmem:[%s1092] sm:$0xff] %v1090
  %1094 = vst [vmem:[%s1092 + $0x8] sm:$0xff] %v1091
  %s1095 = scalar_lea.vmem [#allocation3], 72
  %v1096 = vld [vmem:[%s1095] sm:$0xff]
  %v1097 = vld [vmem:[%s1095 + $0x8] sm:$0xff]
  %v1098 = vld [vmem:[%s1095 + $0x10] sm:$0xff]
  %v1099 = vunpack.c.l.bf16 %v1096
  %v1100 = vunpack.c.l.bf16 %v1097
  %v1101 = vunpack.c.l.bf16 %v1098
  %v1102 = vunpack.c.h.bf16 %v1096
  %v1103 = vunpack.c.h.bf16 %v1097
  %v1104 = vunpack.c.h.bf16 %v1098
  %v1105 = vpack.c.bf16 %v1091, %v1090
  %1106 = vmatprep.subr.bf16.mxu0 %v658
  %1107 = vmatpush1.bf16.msra.mxu0 %v657
  %1108 = vmatprep.subr.bf16.mxu0 %v661
  %1109 = vmatpush1.bf16.msra.mxu0 %v660
  %1110 = vmatprep.subr.bf16.mxu0 %v664
  %1111 = vmatpush1.bf16.msra.mxu0 %v663
  %1112 = vmatprep.subr.bf16.mxu0 %v667
  %1113 = vmatpush1.bf16.msra.mxu0 %v666
  %1114 = vmatprep.subr.bf16.mxu0 %v670
  %1115 = vmatpush1.bf16.msra.mxu0 %v669
  %1116 = vmatprep.subr.bf16.mxu0 %v673
  %1117 = vmatpush1.bf16.msra.mxu0 %v672
  %1118 = vmatprep.subr.bf16.mxu0 %v676
  %1119 = vmatpush1.bf16.msra.mxu0 %v675
  %1120 = vmatprep.subr.bf16.mxu0 %v679
  %1121 = vmatpush1.bf16.msra.mxu0 %v678
  %1122 = vmatprep.subr.bf16.mxu0 0
  %1123 = vmatpush1.bf16.msra.mxu0 0
  %1124 = vmatprep.subr.bf16.mxu0 0
  %1125 = vmatpush1.bf16.msra.mxu0 0
  %1126 = vmatprep.subr.bf16.mxu0 0
  %1127 = vmatpush1.bf16.msra.mxu0 0
  %1128 = vmatprep.subr.bf16.mxu0 0
  %1129 = vmatpush1.bf16.msra.mxu0 0
  %1130 = vmatprep.subr.bf16.mxu0 0
  %1131 = vmatpush1.bf16.msra.mxu0 0
  %1132 = vmatprep.subr.bf16.mxu0 0
  %1133 = vmatpush1.bf16.msra.mxu0 0
  %1134 = vmatprep.subr.bf16.mxu0 0
  %1135 = vmatpush1.bf16.msra.mxu0 0
  %1136 = vmatprep.subr.bf16.mxu0 0
  %1137 = vmatpush1.bf16.msra.mxu0 0
  %1138 = vmatprep.mubr.bf16.mxu0 0
  %1139 = vmatmul.mubr.bf16.gmra.mrb[0].mxu0 %v1105
  %v1140 = vpop.f32.mrb[0].mxu0
  %v1141 = vadd.f32 0.0, %v1140
  %v1142 = vpop.f32.mrb[0].mxu0
  %v1143 = vadd.f32 0.0, %v1142
  %v1144 = vpop.f32.mrb[0].mxu0
  %v1145 = vadd.f32 0.0, %v1144
  %v1146 = vpop.f32.mrb[0].mxu0
  %v1147 = vadd.f32 0.0, %v1146
  %1148 = vdwg.mxu0
  %1149 = vmatprep.subr.bf16.mxu0 0
  %1150 = vmatpush1.bf16.msra.mxu0 %v659
  %1151 = vmatprep.subr.bf16.mxu0 0
  %1152 = vmatpush1.bf16.msra.mxu0 %v662
  %1153 = vmatprep.subr.bf16.mxu0 0
  %1154 = vmatpush1.bf16.msra.mxu0 %v665
  %1155 = vmatprep.subr.bf16.mxu0 0
  %1156 = vmatpush1.bf16.msra.mxu0 %v668
  %1157 = vmatprep.subr.bf16.mxu0 0
  %1158 = vmatpush1.bf16.msra.mxu0 %v671
  %1159 = vmatprep.subr.bf16.mxu0 0
  %1160 = vmatpush1.bf16.msra.mxu0 %v674
  %1161 = vmatprep.subr.bf16.mxu0 0
  %1162 = vmatpush1.bf16.msra.mxu0 %v677
  %1163 = vmatprep.subr.bf16.mxu0 0
  %1164 = vmatpush1.bf16.msra.mxu0 %v680
  %1165 = vmatprep.subr.bf16.mxu0 0
  %1166 = vmatpush1.bf16.msra.mxu0 0
  %1167 = vmatprep.subr.bf16.mxu0 0
  %1168 = vmatpush1.bf16.msra.mxu0 0
  %1169 = vmatprep.subr.bf16.mxu0 0
  %1170 = vmatpush1.bf16.msra.mxu0 0
  %1171 = vmatprep.subr.bf16.mxu0 0
  %1172 = vmatpush1.bf16.msra.mxu0 0
  %1173 = vmatprep.subr.bf16.mxu0 0
  %1174 = vmatpush1.bf16.msra.mxu0 0
  %1175 = vmatprep.subr.bf16.mxu0 0
  %1176 = vmatpush1.bf16.msra.mxu0 0
  %1177 = vmatprep.subr.bf16.mxu0 0
  %1178 = vmatpush1.bf16.msra.mxu0 0
  %1179 = vmatprep.subr.bf16.mxu0 0
  %1180 = vmatpush1.bf16.msra.mxu0 0
  %1181 = vmatprep.mubr.bf16.mxu0 0
  %1182 = vmatmul.mubr.bf16.gmra.mrb[0].mxu0 %v1105
  %v1183 = vpop.f32.mrb[0].mxu0
  %v1184 = vadd.f32 0.0, %v1183
  %v1185 = vpop.f32.mrb[0].mxu0
  %v1186 = vpop.f32.mrb[0].mxu0
  %v1187 = vadd.f32 0.0, %v1186
  %v1188 = vpop.f32.mrb[0].mxu0
  %1189 = vdwg.mxu0
  %v1190 = vadd.f32 %v1099, %v1141
  %v1191 = vadd.f32 %v1102, %v1145
  %v1192 = vmul.f32 %v1190, 0.5
  %v1193 = vmul.f32 %v1191, 0.5
  %v1194 = vtanh.pop %v1192
  %v1195 = vtanh.pop %v1193
  %v1196 = vadd.f32 %v1194, 1.0
  %v1197 = vadd.f32 %v1195, 1.0
  %v1198 = vmul.f32 %v1196, 0.5
  %v1199 = vmul.f32 %v1197, 0.5
  %v1200 = vadd.f32 %v1100, %v1143
  %v1201 = vadd.f32 %v1103, %v1147
  %v1202 = vmul.f32 %v1200, 0.5
  %v1203 = vmul.f32 %v1201, 0.5
  %v1204 = vtanh.pop %v1202
  %v1205 = vtanh.pop %v1203
  %v1206 = vadd.f32 %v1204, 1.0
  %v1207 = vadd.f32 %v1205, 1.0
  %v1208 = vmul.f32 %v1206, 0.5
  %v1209 = vmul.f32 %v1207, 0.5
  %v1210 = vadd.f32 %v1184, %v563
  %v1211 = vadd.f32 %v1187, %v563
  %v1212 = vmul.f32 %v1198, %v1210
  %v1213 = vmul.f32 %v1199, %v1211
  %v1214 = vadd.f32 %v1101, %v1212
  %v1215 = vadd.f32 %v1104, %v1213
  %v1216 = vtanh.pop %v1214
  %v1217 = vtanh.pop %v1215
  %v1218 = vsub.f32 1.0, %v1208
  %v1219 = vsub.f32 1.0, %v1209
  %v1220 = vmul.f32 %v1218, %v1216
  %v1221 = vmul.f32 %v1219, %v1217
  %v1222 = vmul.f32 %v1208, %v1090
  %v1223 = vmul.f32 %v1209, %v1091
  %v1224 = vadd.f32 %v1220, %v1222
  %v1225 = vadd.f32 %v1221, %v1223
  %s1226 = scalar_lea.vmem %s5, 48
  %1227 = vst [vmem:[%s1226] sm:$0xff] %v1224
  %1228 = vst [vmem:[%s1226 + $0x8] sm:$0xff] %v1225
  %s1229 = scalar_lea.vmem [#allocation3], 96
  %v1230 = vld [vmem:[%s1229] sm:$0xff]
  %v1231 = vld [vmem:[%s1229 + $0x8] sm:$0xff]
  %v1232 = vld [vmem:[%s1229 + $0x10] sm:$0xff]
  %v1233 = vunpack.c.l.bf16 %v1230
  %v1234 = vunpack.c.l.bf16 %v1231
  %v1235 = vunpack.c.l.bf16 %v1232
  %v1236 = vunpack.c.h.bf16 %v1230
  %v1237 = vunpack.c.h.bf16 %v1231
  %v1238 = vunpack.c.h.bf16 %v1232
  %v1239 = vpack.c.bf16 %v1225, %v1224
  %1240 = vmatprep.subr.bf16.mxu0 %v658
  %1241 = vmatpush1.bf16.msra.mxu0 %v657
  %1242 = vmatprep.subr.bf16.mxu0 %v661
  %1243 = vmatpush1.bf16.msra.mxu0 %v660
  %1244 = vmatprep.subr.bf16.mxu0 %v664
  %1245 = vmatpush1.bf16.msra.mxu0 %v663
  %1246 = vmatprep.subr.bf16.mxu0 %v667
  %1247 = vmatpush1.bf16.msra.mxu0 %v666
  %1248 = vmatprep.subr.bf16.mxu0 %v670
  %1249 = vmatpush1.bf16.msra.mxu0 %v669
  %1250 = vmatprep.subr.bf16.mxu0 %v673
  %1251 = vmatpush1.bf16.msra.mxu0 %v672
  %1252 = vmatprep.subr.bf16.mxu0 %v676
  %1253 = vmatpush1.bf16.msra.mxu0 %v675
  %1254 = vmatprep.subr.bf16.mxu0 %v679
  %1255 = vmatpush1.bf16.msra.mxu0 %v678
  %1256 = vmatprep.subr.bf16.mxu0 0
  %1257 = vmatpush1.bf16.msra.mxu0 0
  %1258 = vmatprep.subr.bf16.mxu0 0
  %1259 = vmatpush1.bf16.msra.mxu0 0
  %1260 = vmatprep.subr.bf16.mxu0 0
  %1261 = vmatpush1.bf16.msra.mxu0 0
  %1262 = vmatprep.subr.bf16.mxu0 0
  %1263 = vmatpush1.bf16.msra.mxu0 0
  %1264 = vmatprep.subr.bf16.mxu0 0
  %1265 = vmatpush1.bf16.msra.mxu0 0
  %1266 = vmatprep.subr.bf16.mxu0 0
  %1267 = vmatpush1.bf16.msra.mxu0 0
  %1268 = vmatprep.subr.bf16.mxu0 0
  %1269 = vmatpush1.bf16.msra.mxu0 0
  %1270 = vmatprep.subr.bf16.mxu0 0
  %1271 = vmatpush1.bf16.msra.mxu0 0
  %1272 = vmatprep.mubr.bf16.mxu0 0
  %1273 = vmatmul.mubr.bf16.gmra.mrb[0].mxu0 %v1239
  %v1274 = vpop.f32.mrb[0].mxu0
  %v1275 = vadd.f32 0.0, %v1274
  %v1276 = vpop.f32.mrb[0].mxu0
  %v1277 = vadd.f32 0.0, %v1276
  %v1278 = vpop.f32.mrb[0].mxu0
  %v1279 = vadd.f32 0.0, %v1278
  %v1280 = vpop.f32.mrb[0].mxu0
  %v1281 = vadd.f32 0.0, %v1280
  %1282 = vdwg.mxu0
  %1283 = vmatprep.subr.bf16.mxu0 0
  %1284 = vmatpush1.bf16.msra.mxu0 %v659
  %1285 = vmatprep.subr.bf16.mxu0 0
  %1286 = vmatpush1.bf16.msra.mxu0 %v662
  %1287 = vmatprep.subr.bf16.mxu0 0
  %1288 = vmatpush1.bf16.msra.mxu0 %v665
  %1289 = vmatprep.subr.bf16.mxu0 0
  %1290 = vmatpush1.bf16.msra.mxu0 %v668
  %1291 = vmatprep.subr.bf16.mxu0 0
  %1292 = vmatpush1.bf16.msra.mxu0 %v671
  %1293 = vmatprep.subr.bf16.mxu0 0
  %1294 = vmatpush1.bf16.msra.mxu0 %v674
  %1295 = vmatprep.subr.bf16.mxu0 0
  %1296 = vmatpush1.bf16.msra.mxu0 %v677
  %1297 = vmatprep.subr.bf16.mxu0 0
  %1298 = vmatpush1.bf16.msra.mxu0 %v680
  %1299 = vmatprep.subr.bf16.mxu0 0
  %1300 = vmatpush1.bf16.msra.mxu0 0
  %1301 = vmatprep.subr.bf16.mxu0 0
  %1302 = vmatpush1.bf16.msra.mxu0 0
  %1303 = vmatprep.subr.bf16.mxu0 0
  %1304 = vmatpush1.bf16.msra.mxu0 0
  %1305 = vmatprep.subr.bf16.mxu0 0
  %1306 = vmatpush1.bf16.msra.mxu0 0
  %1307 = vmatprep.subr.bf16.mxu0 0
  %1308 = vmatpush1.bf16.msra.mxu0 0
  %1309 = vmatprep.subr.bf16.mxu0 0
  %1310 = vmatpush1.bf16.msra.mxu0 0
  %1311 = vmatprep.subr.bf16.mxu0 0
  %1312 = vmatpush1.bf16.msra.mxu0 0
  %1313 = vmatprep.subr.bf16.mxu0 0
  %1314 = vmatpush1.bf16.msra.mxu0 0
  %1315 = vmatprep.mubr.bf16.mxu0 0
  %1316 = vmatmul.mubr.bf16.gmra.mrb[0].mxu0 %v1239
  %v1317 = vpop.f32.mrb[0].mxu0
  %v1318 = vadd.f32 0.0, %v1317
  %v1319 = vpop.f32.mrb[0].mxu0
  %v1320 = vpop.f32.mrb[0].mxu0
  %v1321 = vadd.f32 0.0, %v1320
  %v1322 = vpop.f32.mrb[0].mxu0
  %1323 = vdwg.mxu0
  %v1324 = vadd.f32 %v1233, %v1275
  %v1325 = vadd.f32 %v1236, %v1279
  %v1326 = vmul.f32 %v1324, 0.5
  %v1327 = vmul.f32 %v1325, 0.5
  %v1328 = vtanh.pop %v1326
  %v1329 = vtanh.pop %v1327
  %v1330 = vadd.f32 %v1328, 1.0
  %v1331 = vadd.f32 %v1329, 1.0
  %v1332 = vmul.f32 %v1330, 0.5
  %v1333 = vmul.f32 %v1331, 0.5
  %v1334 = vadd.f32 %v1234, %v1277
  %v1335 = vadd.f32 %v1237, %v1281
  %v1336 = vmul.f32 %v1334, 0.5
  %v1337 = vmul.f32 %v1335, 0.5
  %v1338 = vtanh.pop %v1336
  %v1339 = vtanh.pop %v1337
  %v1340 = vadd.f32 %v1338, 1.0
  %v1341 = vadd.f32 %v1339, 1.0
  %v1342 = vmul.f32 %v1340, 0.5
  %v1343 = vmul.f32 %v1341, 0.5
  %v1344 = vadd.f32 %v1318, %v563
  %v1345 = vadd.f32 %v1321, %v563
  %v1346 = vmul.f32 %v1332, %v1344
  %v1347 = vmul.f32 %v1333, %v1345
  %v1348 = vadd.f32 %v1235, %v1346
  %v1349 = vadd.f32 %v1238, %v1347
  %v1350 = vtanh.pop %v1348
  %v1351 = vtanh.pop %v1349
  %v1352 = vsub.f32 1.0, %v1342
  %v1353 = vsub.f32 1.0, %v1343
  %v1354 = vmul.f32 %v1352, %v1350
  %v1355 = vmul.f32 %v1353, %v1351
  %v1356 = vmul.f32 %v1342, %v1224
  %v1357 = vmul.f32 %v1343, %v1225
  %v1358 = vadd.f32 %v1354, %v1356
  %v1359 = vadd.f32 %v1355, %v1357
  %s1360 = scalar_lea.vmem %s5, 64
  %1361 = vst [vmem:[%s1360] sm:$0xff] %v1358
  %1362 = vst [vmem:[%s1360 + $0x8] sm:$0xff] %v1359
  %s1363 = scalar_lea.vmem [#allocation3], 120
  %v1364 = vld [vmem:[%s1363] sm:$0xff]
  %v1365 = vld [vmem:[%s1363 + $0x8] sm:$0xff]
  %v1366 = vld [vmem:[%s1363 + $0x10] sm:$0xff]
  %v1367 = vunpack.c.l.bf16 %v1364
  %v1368 = vunpack.c.l.bf16 %v1365
  %v1369 = vunpack.c.l.bf16 %v1366
  %v1370 = vunpack.c.h.bf16 %v1364
  %v1371 = vunpack.c.h.bf16 %v1365
  %v1372 = vunpack.c.h.bf16 %v1366
  %v1373 = vpack.c.bf16 %v1359, %v1358
  %1374 = vmatprep.subr.bf16.mxu0 %v658
  %1375 = vmatpush1.bf16.msra.mxu0 %v657
  %1376 = vmatprep.subr.bf16.mxu0 %v661
  %1377 = vmatpush1.bf16.msra.mxu0 %v660
  %1378 = vmatprep.subr.bf16.mxu0 %v664
  %1379 = vmatpush1.bf16.msra.mxu0 %v663
  %1380 = vmatprep.subr.bf16.mxu0 %v667
  %1381 = vmatpush1.bf16.msra.mxu0 %v666
  %1382 = vmatprep.subr.bf16.mxu0 %v670
  %1383 = vmatpush1.bf16.msra.mxu0 %v669
  %1384 = vmatprep.subr.bf16.mxu0 %v673
  %1385 = vmatpush1.bf16.msra.mxu0 %v672
  %1386 = vmatprep.subr.bf16.mxu0 %v676
  %1387 = vmatpush1.bf16.msra.mxu0 %v675
  %1388 = vmatprep.subr.bf16.mxu0 %v679
  %1389 = vmatpush1.bf16.msra.mxu0 %v678
  %1390 = vmatprep.subr.bf16.mxu0 0
  %1391 = vmatpush1.bf16.msra.mxu0 0
  %1392 = vmatprep.subr.bf16.mxu0 0
  %1393 = vmatpush1.bf16.msra.mxu0 0
  %1394 = vmatprep.subr.bf16.mxu0 0
  %1395 = vmatpush1.bf16.msra.mxu0 0
  %1396 = vmatprep.subr.bf16.mxu0 0
  %1397 = vmatpush1.bf16.msra.mxu0 0
  %1398 = vmatprep.subr.bf16.mxu0 0
  %1399 = vmatpush1.bf16.msra.mxu0 0
  %1400 = vmatprep.subr.bf16.mxu0 0
  %1401 = vmatpush1.bf16.msra.mxu0 0
  %1402 = vmatprep.subr.bf16.mxu0 0
  %1403 = vmatpush1.bf16.msra.mxu0 0
  %1404 = vmatprep.subr.bf16.mxu0 0
  %1405 = vmatpush1.bf16.msra.mxu0 0
  %1406 = vmatprep.mubr.bf16.mxu0 0
  %1407 = vmatmul.mubr.bf16.gmra.mrb[0].mxu0 %v1373
  %v1408 = vpop.f32.mrb[0].mxu0
  %v1409 = vadd.f32 0.0, %v1408
  %v1410 = vpop.f32.mrb[0].mxu0
  %v1411 = vadd.f32 0.0, %v1410
  %v1412 = vpop.f32.mrb[0].mxu0
  %v1413 = vadd.f32 0.0, %v1412
  %v1414 = vpop.f32.mrb[0].mxu0
  %v1415 = vadd.f32 0.0, %v1414
  %1416 = vdwg.mxu0
  %1417 = vmatprep.subr.bf16.mxu0 0
  %1418 = vmatpush1.bf16.msra.mxu0 %v659
  %1419 = vmatprep.subr.bf16.mxu0 0
  %1420 = vmatpush1.bf16.msra.mxu0 %v662
  %1421 = vmatprep.subr.bf16.mxu0 0
  %1422 = vmatpush1.bf16.msra.mxu0 %v665
  %1423 = vmatprep.subr.bf16.mxu0 0
  %1424 = vmatpush1.bf16.msra.mxu0 %v668
  %1425 = vmatprep.subr.bf16.mxu0 0
  %1426 = vmatpush1.bf16.msra.mxu0 %v671
  %1427 = vmatprep.subr.bf16.mxu0 0
  %1428 = vmatpush1.bf16.msra.mxu0 %v674
  %1429 = vmatprep.subr.bf16.mxu0 0
  %1430 = vmatpush1.bf16.msra.mxu0 %v677
  %1431 = vmatprep.subr.bf16.mxu0 0
  %1432 = vmatpush1.bf16.msra.mxu0 %v680
  %1433 = vmatprep.subr.bf16.mxu0 0
  %1434 = vmatpush1.bf16.msra.mxu0 0
  %1435 = vmatprep.subr.bf16.mxu0 0
  %1436 = vmatpush1.bf16.msra.mxu0 0
  %1437 = vmatprep.subr.bf16.mxu0 0
  %1438 = vmatpush1.bf16.msra.mxu0 0
  %1439 = vmatprep.subr.bf16.mxu0 0
  %1440 = vmatpush1.bf16.msra.mxu0 0
  %1441 = vmatprep.subr.bf16.mxu0 0
  %1442 = vmatpush1.bf16.msra.mxu0 0
  %1443 = vmatprep.subr.bf16.mxu0 0
  %1444 = vmatpush1.bf16.msra.mxu0 0
  %1445 = vmatprep.subr.bf16.mxu0 0
  %1446 = vmatpush1.bf16.msra.mxu0 0
  %1447 = vmatprep.subr.bf16.mxu0 0
  %1448 = vmatpush1.bf16.msra.mxu0 0
  %1449 = vmatprep.mubr.bf16.mxu0 0
  %1450 = vmatmul.mubr.bf16.gmra.mrb[0].mxu0 %v1373
  %v1451 = vpop.f32.mrb[0].mxu0
  %v1452 = vadd.f32 0.0, %v1451
  %v1453 = vpop.f32.mrb[0].mxu0
  %v1454 = vpop.f32.mrb[0].mxu0
  %v1455 = vadd.f32 0.0, %v1454
  %v1456 = vpop.f32.mrb[0].mxu0
  %1457 = vdwg.mxu0
  %v1458 = vadd.f32 %v1367, %v1409
  %v1459 = vadd.f32 %v1370, %v1413
  %v1460 = vmul.f32 %v1458, 0.5
  %v1461 = vmul.f32 %v1459, 0.5
  %v1462 = vtanh.pop %v1460
  %v1463 = vtanh.pop %v1461
  %v1464 = vadd.f32 %v1462, 1.0
  %v1465 = vadd.f32 %v1463, 1.0
  %v1466 = vmul.f32 %v1464, 0.5
  %v1467 = vmul.f32 %v1465, 0.5
  %v1468 = vadd.f32 %v1368, %v1411
  %v1469 = vadd.f32 %v1371, %v1415
  %v1470 = vmul.f32 %v1468, 0.5
  %v1471 = vmul.f32 %v1469, 0.5
  %v1472 = vtanh.pop %v1470
  %v1473 = vtanh.pop %v1471
  %v1474 = vadd.f32 %v1472, 1.0
  %v1475 = vadd.f32 %v1473, 1.0
  %v1476 = vmul.f32 %v1474, 0.5
  %v1477 = vmul.f32 %v1475, 0.5
  %v1478 = vadd.f32 %v1452, %v563
  %v1479 = vadd.f32 %v1455, %v563
  %v1480 = vmul.f32 %v1466, %v1478
  %v1481 = vmul.f32 %v1467, %v1479
  %v1482 = vadd.f32 %v1369, %v1480
  %v1483 = vadd.f32 %v1372, %v1481
  %v1484 = vtanh.pop %v1482
  %v1485 = vtanh.pop %v1483
  %v1486 = vsub.f32 1.0, %v1476
  %v1487 = vsub.f32 1.0, %v1477
  %v1488 = vmul.f32 %v1486, %v1484
  %v1489 = vmul.f32 %v1487, %v1485
  %v1490 = vmul.f32 %v1476, %v1358
  %v1491 = vmul.f32 %v1477, %v1359
  %v1492 = vadd.f32 %v1488, %v1490
  %v1493 = vadd.f32 %v1489, %v1491
  %s1494 = scalar_lea.vmem %s5, 80
  %1495 = vst [vmem:[%s1494] sm:$0xff] %v1492
  %1496 = vst [vmem:[%s1494 + $0x8] sm:$0xff] %v1493
  %s1497 = scalar_lea.vmem [#allocation3], 144
  %v1498 = vld [vmem:[%s1497] sm:$0xff]
  %v1499 = vld [vmem:[%s1497 + $0x8] sm:$0xff]
  %v1500 = vld [vmem:[%s1497 + $0x10] sm:$0xff]
  %v1501 = vunpack.c.l.bf16 %v1498
  %v1502 = vunpack.c.l.bf16 %v1499
  %v1503 = vunpack.c.l.bf16 %v1500
  %v1504 = vunpack.c.h.bf16 %v1498
  %v1505 = vunpack.c.h.bf16 %v1499
  %v1506 = vunpack.c.h.bf16 %v1500
  %v1507 = vpack.c.bf16 %v1493, %v1492
  %1508 = vmatprep.subr.bf16.mxu0 %v658
  %1509 = vmatpush1.bf16.msra.mxu0 %v657
  %1510 = vmatprep.subr.bf16.mxu0 %v661
  %1511 = vmatpush1.bf16.msra.mxu0 %v660
  %1512 = vmatprep.subr.bf16.mxu0 %v664
  %1513 = vmatpush1.bf16.msra.mxu0 %v663
  %1514 = vmatprep.subr.bf16.mxu0 %v667
  %1515 = vmatpush1.bf16.msra.mxu0 %v666
  %1516 = vmatprep.subr.bf16.mxu0 %v670
  %1517 = vmatpush1.bf16.msra.mxu0 %v669
  %1518 = vmatprep.subr.bf16.mxu0 %v673
  %1519 = vmatpush1.bf16.msra.mxu0 %v672
  %1520 = vmatprep.subr.bf16.mxu0 %v676
  %1521 = vmatpush1.bf16.msra.mxu0 %v675
  %1522 = vmatprep.subr.bf16.mxu0 %v679
  %1523 = vmatpush1.bf16.msra.mxu0 %v678
  %1524 = vmatprep.subr.bf16.mxu0 0
  %1525 = vmatpush1.bf16.msra.mxu0 0
  %1526 = vmatprep.subr.bf16.mxu0 0
  %1527 = vmatpush1.bf16.msra.mxu0 0
  %1528 = vmatprep.subr.bf16.mxu0 0
  %1529 = vmatpush1.bf16.msra.mxu0 0
  %1530 = vmatprep.subr.bf16.mxu0 0
  %1531 = vmatpush1.bf16.msra.mxu0 0
  %1532 = vmatprep.subr.bf16.mxu0 0
  %1533 = vmatpush1.bf16.msra.mxu0 0
  %1534 = vmatprep.subr.bf16.mxu0 0
  %1535 = vmatpush1.bf16.msra.mxu0 0
  %1536 = vmatprep.subr.bf16.mxu0 0
  %1537 = vmatpush1.bf16.msra.mxu0 0
  %1538 = vmatprep.subr.bf16.mxu0 0
  %1539 = vmatpush1.bf16.msra.mxu0 0
  %1540 = vmatprep.mubr.bf16.mxu0 0
  %1541 = vmatmul.mubr.bf16.gmra.mrb[0].mxu0 %v1507
  %v1542 = vpop.f32.mrb[0].mxu0
  %v1543 = vadd.f32 0.0, %v1542
  %v1544 = vpop.f32.mrb[0].mxu0
  %v1545 = vadd.f32 0.0, %v1544
  %v1546 = vpop.f32.mrb[0].mxu0
  %v1547 = vadd.f32 0.0, %v1546
  %v1548 = vpop.f32.mrb[0].mxu0
  %v1549 = vadd.f32 0.0, %v1548
  %1550 = vdwg.mxu0
  %1551 = vmatprep.subr.bf16.mxu0 0
  %1552 = vmatpush1.bf16.msra.mxu0 %v659
  %1553 = vmatprep.subr.bf16.mxu0 0
  %1554 = vmatpush1.bf16.msra.mxu0 %v662
  %1555 = vmatprep.subr.bf16.mxu0 0
  %1556 = vmatpush1.bf16.msra.mxu0 %v665
  %1557 = vmatprep.subr.bf16.mxu0 0
  %1558 = vmatpush1.bf16.msra.mxu0 %v668
  %1559 = vmatprep.subr.bf16.mxu0 0
  %1560 = vmatpush1.bf16.msra.mxu0 %v671
  %1561 = vmatprep.subr.bf16.mxu0 0
  %1562 = vmatpush1.bf16.msra.mxu0 %v674
  %1563 = vmatprep.subr.bf16.mxu0 0
  %1564 = vmatpush1.bf16.msra.mxu0 %v677
  %1565 = vmatprep.subr.bf16.mxu0 0
  %1566 = vmatpush1.bf16.msra.mxu0 %v680
  %1567 = vmatprep.subr.bf16.mxu0 0
  %1568 = vmatpush1.bf16.msra.mxu0 0
  %1569 = vmatprep.subr.bf16.mxu0 0
  %1570 = vmatpush1.bf16.msra.mxu0 0
  %1571 = vmatprep.subr.bf16.mxu0 0
  %1572 = vmatpush1.bf16.msra.mxu0 0
  %1573 = vmatprep.subr.bf16.mxu0 0
  %1574 = vmatpush1.bf16.msra.mxu0 0
  %1575 = vmatprep.subr.bf16.mxu0 0
  %1576 = vmatpush1.bf16.msra.mxu0 0
  %1577 = vmatprep.subr.bf16.mxu0 0
  %1578 = vmatpush1.bf16.msra.mxu0 0
  %1579 = vmatprep.subr.bf16.mxu0 0
  %1580 = vmatpush1.bf16.msra.mxu0 0
  %1581 = vmatprep.subr.bf16.mxu0 0
  %1582 = vmatpush1.bf16.msra.mxu0 0
  %1583 = vmatprep.mubr.bf16.mxu0 0
  %1584 = vmatmul.mubr.bf16.gmra.mrb[0].mxu0 %v1507
  %v1585 = vpop.f32.mrb[0].mxu0
  %v1586 = vadd.f32 0.0, %v1585
  %v1587 = vpop.f32.mrb[0].mxu0
  %v1588 = vpop.f32.mrb[0].mxu0
  %v1589 = vadd.f32 0.0, %v1588
  %v1590 = vpop.f32.mrb[0].mxu0
  %1591 = vdwg.mxu0
  %v1592 = vadd.f32 %v1501, %v1543
  %v1593 = vadd.f32 %v1504, %v1547
  %v1594 = vmul.f32 %v1592, 0.5
  %v1595 = vmul.f32 %v1593, 0.5
  %v1596 = vtanh.pop %v1594
  %v1597 = vtanh.pop %v1595
  %v1598 = vadd.f32 %v1596, 1.0
  %v1599 = vadd.f32 %v1597, 1.0
  %v1600 = vmul.f32 %v1598, 0.5
  %v1601 = vmul.f32 %v1599, 0.5
  %v1602 = vadd.f32 %v1502, %v1545
  %v1603 = vadd.f32 %v1505, %v1549
  %v1604 = vmul.f32 %v1602, 0.5
  %v1605 = vmul.f32 %v1603, 0.5
  %v1606 = vtanh.pop %v1604
  %v1607 = vtanh.pop %v1605
  %v1608 = vadd.f32 %v1606, 1.0
  %v1609 = vadd.f32 %v1607, 1.0
  %v1610 = vmul.f32 %v1608, 0.5
  %v1611 = vmul.f32 %v1609, 0.5
  %v1612 = vadd.f32 %v1586, %v563
  %v1613 = vadd.f32 %v1589, %v563
  %v1614 = vmul.f32 %v1600, %v1612
  %v1615 = vmul.f32 %v1601, %v1613
  %v1616 = vadd.f32 %v1503, %v1614
  %v1617 = vadd.f32 %v1506, %v1615
  %v1618 = vtanh.pop %v1616
  %v1619 = vtanh.pop %v1617
  %v1620 = vsub.f32 1.0, %v1610
  %v1621 = vsub.f32 1.0, %v1611
  %v1622 = vmul.f32 %v1620, %v1618
  %v1623 = vmul.f32 %v1621, %v1619
  %v1624 = vmul.f32 %v1610, %v1492
  %v1625 = vmul.f32 %v1611, %v1493
  %v1626 = vadd.f32 %v1622, %v1624
  %v1627 = vadd.f32 %v1623, %v1625
  %s1628 = scalar_lea.vmem %s5, 96
  %1629 = vst [vmem:[%s1628] sm:$0xff] %v1626
  %1630 = vst [vmem:[%s1628 + $0x8] sm:$0xff] %v1627
  %s1631 = scalar_lea.vmem [#allocation3], 168
  %v1632 = vld [vmem:[%s1631] sm:$0xff]
  %v1633 = vld [vmem:[%s1631 + $0x8] sm:$0xff]
  %v1634 = vld [vmem:[%s1631 + $0x10] sm:$0xff]
  %v1635 = vunpack.c.l.bf16 %v1632
  %v1636 = vunpack.c.l.bf16 %v1633
  %v1637 = vunpack.c.l.bf16 %v1634
  %v1638 = vunpack.c.h.bf16 %v1632
  %v1639 = vunpack.c.h.bf16 %v1633
  %v1640 = vunpack.c.h.bf16 %v1634
  %v1641 = vpack.c.bf16 %v1627, %v1626
  %1642 = vmatprep.subr.bf16.mxu0 %v658
  %1643 = vmatpush1.bf16.msra.mxu0 %v657
  %1644 = vmatprep.subr.bf16.mxu0 %v661
  %1645 = vmatpush1.bf16.msra.mxu0 %v660
  %1646 = vmatprep.subr.bf16.mxu0 %v664
  %1647 = vmatpush1.bf16.msra.mxu0 %v663
  %1648 = vmatprep.subr.bf16.mxu0 %v667
  %1649 = vmatpush1.bf16.msra.mxu0 %v666
  %1650 = vmatprep.subr.bf16.mxu0 %v670
  %1651 = vmatpush1.bf16.msra.mxu0 %v669
  %1652 = vmatprep.subr.bf16.mxu0 %v673
  %1653 = vmatpush1.bf16.msra.mxu0 %v672
  %1654 = vmatprep.subr.bf16.mxu0 %v676
  %1655 = vmatpush1.bf16.msra.mxu0 %v675
  %1656 = vmatprep.subr.bf16.mxu0 %v679
  %1657 = vmatpush1.bf16.msra.mxu0 %v678
  %1658 = vmatprep.subr.bf16.mxu0 0
  %1659 = vmatpush1.bf16.msra.mxu0 0
  %1660 = vmatprep.subr.bf16.mxu0 0
  %1661 = vmatpush1.bf16.msra.mxu0 0
  %1662 = vmatprep.subr.bf16.mxu0 0
  %1663 = vmatpush1.bf16.msra.mxu0 0
  %1664 = vmatprep.subr.bf16.mxu0 0
  %1665 = vmatpush1.bf16.msra.mxu0 0
  %1666 = vmatprep.subr.bf16.mxu0 0
  %1667 = vmatpush1.bf16.msra.mxu0 0
  %1668 = vmatprep.subr.bf16.mxu0 0
  %1669 = vmatpush1.bf16.msra.mxu0 0
  %1670 = vmatprep.subr.bf16.mxu0 0
  %1671 = vmatpush1.bf16.msra.mxu0 0
  %1672 = vmatprep.subr.bf16.mxu0 0
  %1673 = vmatpush1.bf16.msra.mxu0 0
  %1674 = vmatprep.mubr.bf16.mxu0 0
  %1675 = vmatmul.mubr.bf16.gmra.mrb[0].mxu0 %v1641
  %v1676 = vpop.f32.mrb[0].mxu0
  %v1677 = vadd.f32 0.0, %v1676
  %v1678 = vpop.f32.mrb[0].mxu0
  %v1679 = vadd.f32 0.0, %v1678
  %v1680 = vpop.f32.mrb[0].mxu0
  %v1681 = vadd.f32 0.0, %v1680
  %v1682 = vpop.f32.mrb[0].mxu0
  %v1683 = vadd.f32 0.0, %v1682
  %1684 = vdwg.mxu0
  %1685 = vmatprep.subr.bf16.mxu0 0
  %1686 = vmatpush1.bf16.msra.mxu0 %v659
  %1687 = vmatprep.subr.bf16.mxu0 0
  %1688 = vmatpush1.bf16.msra.mxu0 %v662
  %1689 = vmatprep.subr.bf16.mxu0 0
  %1690 = vmatpush1.bf16.msra.mxu0 %v665
  %1691 = vmatprep.subr.bf16.mxu0 0
  %1692 = vmatpush1.bf16.msra.mxu0 %v668
  %1693 = vmatprep.subr.bf16.mxu0 0
  %1694 = vmatpush1.bf16.msra.mxu0 %v671
  %1695 = vmatprep.subr.bf16.mxu0 0
  %1696 = vmatpush1.bf16.msra.mxu0 %v674
  %1697 = vmatprep.subr.bf16.mxu0 0
  %1698 = vmatpush1.bf16.msra.mxu0 %v677
  %1699 = vmatprep.subr.bf16.mxu0 0
  %1700 = vmatpush1.bf16.msra.mxu0 %v680
  %1701 = vmatprep.subr.bf16.mxu0 0
  %1702 = vmatpush1.bf16.msra.mxu0 0
  %1703 = vmatprep.subr.bf16.mxu0 0
  %1704 = vmatpush1.bf16.msra.mxu0 0
  %1705 = vmatprep.subr.bf16.mxu0 0
  %1706 = vmatpush1.bf16.msra.mxu0 0
  %1707 = vmatprep.subr.bf16.mxu0 0
  %1708 = vmatpush1.bf16.msra.mxu0 0
  %1709 = vmatprep.subr.bf16.mxu0 0
  %1710 = vmatpush1.bf16.msra.mxu0 0
  %1711 = vmatprep.subr.bf16.mxu0 0
  %1712 = vmatpush1.bf16.msra.mxu0 0
  %1713 = vmatprep.subr.bf16.mxu0 0
  %1714 = vmatpush1.bf16.msra.mxu0 0
  %1715 = vmatprep.subr.bf16.mxu0 0
  %1716 = vmatpush1.bf16.msra.mxu0 0
  %1717 = vmatprep.mubr.bf16.mxu0 0
  %1718 = vmatmul.mubr.bf16.gmra.mrb[0].mxu0 %v1641
  %v1719 = vpop.f32.mrb[0].mxu0
  %v1720 = vadd.f32 0.0, %v1719
  %v1721 = vpop.f32.mrb[0].mxu0
  %v1722 = vpop.f32.mrb[0].mxu0
  %v1723 = vadd.f32 0.0, %v1722
  %v1724 = vpop.f32.mrb[0].mxu0
  %1725 = vdwg.mxu0
  %v1726 = vadd.f32 %v1635, %v1677
  %v1727 = vadd.f32 %v1638, %v1681
  %v1728 = vmul.f32 %v1726, 0.5
  %v1729 = vmul.f32 %v1727, 0.5
  %v1730 = vtanh.pop %v1728
  %v1731 = vtanh.pop %v1729
  %v1732 = vadd.f32 %v1730, 1.0
  %v1733 = vadd.f32 %v1731, 1.0
  %v1734 = vmul.f32 %v1732, 0.5
  %v1735 = vmul.f32 %v1733, 0.5
  %v1736 = vadd.f32 %v1636, %v1679
  %v1737 = vadd.f32 %v1639, %v1683
  %v1738 = vmul.f32 %v1736, 0.5
  %v1739 = vmul.f32 %v1737, 0.5
  %v1740 = vtanh.pop %v1738
  %v1741 = vtanh.pop %v1739
  %v1742 = vadd.f32 %v1740, 1.0
  %v1743 = vadd.f32 %v1741, 1.0
  %v1744 = vmul.f32 %v1742, 0.5
  %v1745 = vmul.f32 %v1743, 0.5
  %v1746 = vadd.f32 %v1720, %v563
  %v1747 = vadd.f32 %v1723, %v563
  %v1748 = vmul.f32 %v1734, %v1746
  %v1749 = vmul.f32 %v1735, %v1747
  %v1750 = vadd.f32 %v1637, %v1748
  %v1751 = vadd.f32 %v1640, %v1749
  %v1752 = vtanh.pop %v1750
  %v1753 = vtanh.pop %v1751
  %v1754 = vsub.f32 1.0, %v1744
  %v1755 = vsub.f32 1.0, %v1745
  %v1756 = vmul.f32 %v1754, %v1752
  %v1757 = vmul.f32 %v1755, %v1753
  %v1758 = vmul.f32 %v1744, %v1626
  %v1759 = vmul.f32 %v1745, %v1627
  %v1760 = vadd.f32 %v1756, %v1758
  %v1761 = vadd.f32 %v1757, %v1759
  %s1762 = scalar_lea.vmem %s5, 112
  %1763 = vst [vmem:[%s1762] sm:$0xff] %v1760
  %1764 = vst [vmem:[%s1762 + $0x8] sm:$0xff] %v1761
  %1765 = vst [vmem:[#allocation2] sm:$0xff] %v1760
  %1766 = vst [vmem:[#allocation2 + $0x8] sm:$0xff] %v1761
  // Predicated region
  $region26: #{leaf_rnn_forward.1} parent=0 // pred_check
    _
  $region27: #{leaf_rnn_forward.1} parent=0 // pred_check_branch
    %1768 = sbr.rel (0) target = $region29
  $region28: #{leaf_rnn_forward.1} parent=0 // pred_region
    _
  $region29: #{leaf_rnn_forward.1} parent=0 // pred_fallthru
    _
  // Predicated region
  $region30: #{leaf_rnn_forward.1} parent=0 // pred_check
    _
  $region31: #{leaf_rnn_forward.1} parent=0 // pred_check_branch
    %1770 = sbr.rel (0) target = $region33
  $region32: #{leaf_rnn_forward.1} parent=0 // pred_region
    _
  $region33: #{leaf_rnn_forward.1} parent=0 // pred_fallthru
    _

</llo_original>
